<compile_context>
chip_gen: v7x
topology: tpu7x:2x2x1
jax: 0.10.0
libtpu: 0.0.40
codegen_flags: <defaults>
</compile_context>

<pallas_src>
import functools
import math

import jax
import jax.numpy as jnp
from jax.experimental import pallas as pl
from jax.experimental.pallas import tpu as pltpu


def _round_up(x, m):
    return (x + m - 1) // m * m


def _buffered_spec(block_shape, index_map, depth=3):
    """BlockSpec for the streamed O(N^2) adjacency operand (deeper buffering if supported)."""
    if hasattr(pl, "Buffered"):
        try:
            return pl.BlockSpec(block_shape, index_map, pipeline_mode=pl.Buffered(depth))
        except TypeError:  # older BlockSpec signature: default 2-deep pipelining
            pass
    return pl.BlockSpec(block_shape, index_map)


# ----------------------------------------------------------------------------
# Fully fused small-N kernel: both layers + max-pool readout, grid=(1,),
# whole graph resident in VMEM.
# ----------------------------------------------------------------------------
def _fused_encoder_kernel(a_ref, x_ref, invdeg_ref, mask_ref, w0_ref, w1_ref,
                          e_ref, f_ref, *, in_p, hid_p):
    # int8 0/1 adjacency -> bf16 for the MXU (cheap VPU casts)
    a = a_ref[...].astype(jnp.float32).astype(jnp.bfloat16)
    x = x_ref[...]
    inv = invdeg_ref[...]

    # ---- layer 0: in -> hidden, ReLU -------------------------------------
    neigh0 = jnp.dot(a, x, preferred_element_type=jnp.float32) * inv
    h = (jnp.dot(x, w0_ref[:in_p, :], preferred_element_type=jnp.float32)
         + jnp.dot(neigh0.astype(jnp.bfloat16), w0_ref[in_p:, :],
                   preferred_element_type=jnp.float32))
    h = jnp.maximum(h, 0.0).astype(jnp.bfloat16)

    # ---- layer 1: hidden -> out, no activation ----------------------------
    neigh1 = jnp.dot(a, h, preferred_element_type=jnp.float32) * inv
    e = (jnp.dot(h, w1_ref[:hid_p, :], preferred_element_type=jnp.float32)
         + jnp.dot(neigh1.astype(jnp.bfloat16), w1_ref[hid_p:, :],
                   preferred_element_type=jnp.float32))
    e_ref[...] = e.astype(e_ref.dtype)

    # ---- MaxPooling readout over real (unpadded) nodes --------------------
    masked = jnp.where(mask_ref[...] > 0.5, e, -jnp.inf)
    f_ref[...] = jnp.max(masked, axis=0, keepdims=True).astype(f_ref.dtype)


def sage_encoder_fused(a_i8, x_p, invdeg_p, mask_p, w_cat0, w_cat1):
    n_pad, in_p = x_p.shape
    hid_p = w_cat1.shape[0] // 2
    out_p = w_cat1.shape[1]
    kernel = functools.partial(_fused_encoder_kernel, in_p=in_p, hid_p=hid_p)
    e_p, f_p = pl.pallas_call(
        kernel,
        out_shape=(jax.ShapeDtypeStruct((n_pad, out_p), jnp.float32),
                   jax.ShapeDtypeStruct((1, out_p), jnp.float32)),
        grid_spec=pltpu.PrefetchScalarGridSpec(
            num_scalar_prefetch=0,
            grid=(1,),
            in_specs=[
                pl.BlockSpec((n_pad, n_pad), lambda i: (0, 0)),     # A (int8, resident)
                pl.BlockSpec((n_pad, in_p), lambda i: (0, 0)),      # X
                pl.BlockSpec((n_pad, 1), lambda i: (0, 0)),         # 1 / deg
                pl.BlockSpec((n_pad, 1), lambda i: (0, 0)),         # real-node mask
                pl.BlockSpec((2 * in_p, hid_p), lambda i: (0, 0)),  # [W_self0; W_neigh0]
                pl.BlockSpec((2 * hid_p, out_p), lambda i: (0, 0)), # [W_self1; W_neigh1]
            ],
            out_specs=(
                pl.BlockSpec((n_pad, out_p), lambda i: (0, 0)),     # e (node embeddings)
                pl.BlockSpec((1, out_p), lambda i: (0, 0)),         # f (graph embedding)
            ),
        ),
        compiler_params=pltpu.CompilerParams(dimension_semantics=("arbitrary",)),
    )(a_i8, x_p, invdeg_p, mask_p, w_cat0, w_cat1)
    return e_p, f_p


# ----------------------------------------------------------------------------
# Tiled GraphSAGE layer: out = act([X_dst, (A @ X) * inv_deg] @ W_cat)
# (optionally fuses the max-pool readout into the finalize of the last layer)
# ----------------------------------------------------------------------------
def _sage_layer_kernel(a_ref, xsrc_ref, xdst_ref, invdeg_ref, wcat_ref, mask_ref,
                       *rest, din, tk, apply_relu, do_pool):
    if do_pool:
        o_ref, f_ref, acc_ref, max_ref = rest
    else:
        o_ref, acc_ref = rest

    i = pl.program_id(0)          # dst tile
    k = pl.program_id(1)          # src tile (reduction axis, last)

    @pl.when(k == 0)
    def _init_acc():
        acc_ref[...] = jnp.zeros_like(acc_ref)

    if do_pool:
        @pl.when(jnp.logical_and(i == 0, k == 0))
        def _init_max():
            max_ref[...] = jnp.full_like(max_ref, -jnp.inf)

    # int8 0/1 adjacency tile -> bf16 (VPU, hides under the MXU)
    a = a_ref[...].astype(jnp.float32).astype(jnp.bfloat16)
    start = pl.multiple_of(k * tk, tk)
    xsrc = xsrc_ref[pl.ds(start, tk), :]          # X_src is resident; static-stride slice
    acc_ref[...] += jnp.dot(a, xsrc, preferred_element_type=jnp.float32)

    @pl.when(k == pl.num_programs(1) - 1)
    def _finalize():
        neigh = (acc_ref[...] * invdeg_ref[...]).astype(jnp.bfloat16)
        # fused self + neighbour projection: two dots on static W_cat views (no concat buffer)
        out = (jnp.dot(xdst_ref[...], wcat_ref[:din, :], preferred_element_type=jnp.float32)
               + jnp.dot(neigh, wcat_ref[din:, :], preferred_element_type=jnp.float32))
        if apply_relu:
            out = jnp.maximum(out, 0.0)
        o_ref[...] = out.astype(o_ref.dtype)

        if do_pool:
            masked = jnp.where(mask_ref[...] > 0.5, out, -jnp.inf)   # padded rows -> -inf
            max_ref[...] = jnp.maximum(max_ref[...],
                                       jnp.max(masked, axis=0, keepdims=True))

            @pl.when(i == pl.num_programs(0) - 1)
            def _writeback_pool():
                f_ref[...] = max_ref[...].astype(f_ref.dtype)


def sage_layer(x, a_i8, inv_deg, w_cat, mask, *, apply_relu, out_dtype, do_pool,
               tm=512, tk=512):
    n, din = x.shape
    dout = w_cat.shape[1]
    assert a_i8.shape == (n, n) and w_cat.shape[0] == 2 * din
    assert n % tm == 0 and n % tk == 0
    grid = (n // tm, n // tk)

    kernel = functools.partial(_sage_layer_kernel, din=din, tk=tk,
                               apply_relu=apply_relu, do_pool=do_pool)

    in_specs = [
        _buffered_spec((tm, tk), lambda i, k: (i, k)),        # A tile (int8, streamed)
        pl.BlockSpec((n, din), lambda i, k: (0, 0)),          # X src: fully VMEM-resident
        pl.BlockSpec((tm, din), lambda i, k: (i, 0)),         # X dst (self term)
        pl.BlockSpec((tm, 1), lambda i, k: (i, 0)),           # 1 / deg
        pl.BlockSpec((2 * din, dout), lambda i, k: (0, 0)),   # W_cat (resident)
        pl.BlockSpec((tm, 1), lambda i, k: (i, 0)),           # real-node mask
    ]
    out_shapes = [jax.ShapeDtypeStruct((n, dout), out_dtype)]
    out_specs = [pl.BlockSpec((tm, dout), lambda i, k: (i, 0))]
    scratch = [pltpu.VMEM((tm, din), jnp.float32)]            # A@X accumulator
    if do_pool:
        out_shapes.append(jax.ShapeDtypeStruct((1, dout), jnp.float32))
        out_specs.append(pl.BlockSpec((1, dout), lambda i, k: (0, 0)))
        scratch.append(pltpu.VMEM((1, dout), jnp.float32))    # running max

    flops = 2 * n * n * din + 2 * n * (2 * din) * dout
    bytes_accessed = (a_i8.size                               # int8 A, read once
                      + 2 * x.size * x.dtype.itemsize         # resident X src + X dst
                      + w_cat.size * w_cat.dtype.itemsize
                      + n * dout * jnp.dtype(out_dtype).itemsize)

    # The fused pool accumulates across dst tiles -> dst axis must be sequential then.
    dim_sem = ("arbitrary", "arbitrary") if do_pool else ("parallel", "arbitrary")

    result = pl.pallas_call(
        kernel,
        out_shape=tuple(out_shapes),
        grid_spec=pltpu.PrefetchScalarGridSpec(
            num_scalar_prefetch=0,
            grid=grid,
            in_specs=in_specs,
            out_specs=tuple(out_specs),
            scratch_shapes=scratch,
        ),
        compiler_params=pltpu.CompilerParams(dimension_semantics=dim_sem),
        cost_estimate=pl.CostEstimate(flops=flops, transcendentals=0,
                                      bytes_accessed=bytes_accessed),
    )(a_i8, x, x, inv_deg, w_cat, mask)

    if do_pool:
        return result            # (e, f)
    return result[0]             # e only


# ----------------------------------------------------------------------------
# Host-side (per-graph / per-model, hoisted) precompute
# ----------------------------------------------------------------------------
def preprocess_graph(adj, n_pad):
    """Padded int8 adjacency, 1/max(deg,1), and a real-node mask. Do once per graph."""
    n = adj.shape[0]
    deg = jnp.sum(adj, axis=1, keepdims=True)
    inv_deg = 1.0 / jnp.maximum(deg, 1.0)
    a_i8 = jnp.zeros((n_pad, n_pad), jnp.int8).at[:n, :n].set(adj.astype(jnp.int8))
    invdeg_p = jnp.zeros((n_pad, 1), jnp.float32).at[:n].set(inv_deg.astype(jnp.float32))
    mask_p = jnp.zeros((n_pad, 1), jnp.float32).at[:n].set(1.0)
    return a_i8, invdeg_p, mask_p


def prep_weights(w_self, w_neigh, kp, mp):
    """Pad to lane-dense dims and stack [W_self; W_neigh] -> single K = 2*D projection."""
    def pad_w(w):
        k, m = w.shape
        return jnp.zeros((kp, mp), jnp.bfloat16).at[:k, :m].set(w.astype(jnp.bfloat16))
    return jnp.concatenate([pad_w(w_self), pad_w(w_neigh)], axis=0)


# ----------------------------------------------------------------------------
# Full SAGEEncoder forward (mirrors the PyTorch module): returns (f, e)
# ----------------------------------------------------------------------------
def sage_encoder_forward(adj, x, w_self0, w_neigh0, w_self1, w_neigh1,
                         *, tm=512, tk=512, force_path=None):
    """adj[dst, src] = 1.0 for edge src->dst; x: (N, in_dim)."""
    n, in_dim = x.shape
    hidden_dim = w_self0.shape[1]
    out_dim = w_self1.shape[1]

    in_p = _round_up(in_dim, 128)
    hid_p = _round_up(hidden_dim, 128)
    out_p = _round_up(out_dim, 128)

    # Fused single-call path when the whole (padded) graph fits comfortably in VMEM.
    n_fused = _round_up(n, 256)
    fused_bytes = (n_fused * n_fused                          # int8 A
                   + n_fused * (in_p + hid_p) * 2             # X, H (bf16)
                   + 3 * n_fused * max(in_p, hid_p, out_p) * 4)  # f32 intermediates
    if force_path == "fused":
        use_fused = True
    elif force_path == "tiled":
        use_fused = False
    else:
        use_fused = fused_bytes <= (6 << 20)

    if use_fused:
        n_pad = n_fused
    else:
        tm = max(128, min(tm, _round_up(n, 128)))
        tk = max(128, min(tk, _round_up(n, 128)))
        n_pad = _round_up(n, math.lcm(tm, tk))

    a_i8, invdeg_p, mask_p = preprocess_graph(adj, n_pad)
    x_p = jnp.zeros((n_pad, in_p), jnp.bfloat16).at[:n, :in_dim].set(x.astype(jnp.bfloat16))
    w_cat0 = prep_weights(w_self0, w_neigh0, in_p, hid_p)
    w_cat1 = prep_weights(w_self1, w_neigh1, hid_p, out_p)

    if use_fused:
        e_p, f_p = sage_encoder_fused(a_i8, x_p, invdeg_p, mask_p, w_cat0, w_cat1)
    else:
        h = sage_layer(x_p, a_i8, invdeg_p, w_cat0, mask_p,
                       apply_relu=True, out_dtype=jnp.bfloat16, do_pool=False,
                       tm=tm, tk=tk)
        e_p, f_p = sage_layer(h, a_i8, invdeg_p, w_cat1, mask_p,
                              apply_relu=False, out_dtype=jnp.float32, do_pool=True,
                              tm=tm, tk=tk)

    return f_p[:, :out_dim], e_p[:n, :out_dim]


# ----------------------------------------------------------------------------
if __name__ == "__main__":
    key = jax.random.PRNGKey(0)
    n_nodes = 200                               # not a tile multiple -> exercises padding
    in_dim, hidden_dim, out_dim = 128, 128, 128

    k_feat, k_adj, k0, k1, k2, k3 = jax.random.split(key, 6)
    x = jax.random.normal(k_feat, (n_nodes, in_dim), jnp.float32)
    adj = (jax.random.uniform(k_adj, (n_nodes, n_nodes)) < 0.05).astype(jnp.float32)

    def init_w(k, fan_in, fan_out):
        return jax.random.normal(k, (fan_in, fan_out), jnp.float32) / jnp.sqrt(fan_in)

    w_self0 = init_w(k0, in_dim, hidden_dim)
    w_neigh0 = init_w(k1, in_dim, hidden_dim)
    w_self1 = init_w(k2, hidden_dim, out_dim)
    w_neigh1 = init_w(k3, hidden_dim, out_dim)

    # 1) fused single-call path (the natural choice at this size)
    fwd_fused = jax.jit(functools.partial(sage_encoder_forward, force_path="fused"))
    f, e = jax.block_until_ready(fwd_fused(adj, x, w_self0, w_neigh0, w_self1, w_neigh1))

    # 2) tiled path with a multi-step grid (exercises accumulation + fused pool across tiles)
    fwd_tiled = jax.jit(functools.partial(sage_encoder_forward,
                                          force_path="tiled", tm=128, tk=128))
    f_t, e_t = jax.block_until_ready(fwd_tiled(adj, x, w_self0, w_neigh0, w_self1, w_neigh1))

    # ---- pure-JAX reference (same bf16 casts, f32 accumulation) --------------
    def ref_layer(xb, ab, invd, w_s, w_n, relu):
        neigh = jnp.dot(ab, xb, preferred_element_type=jnp.float32) * invd
        out = (jnp.dot(xb, w_s.astype(jnp.bfloat16), preferred_element_type=jnp.float32)
               + jnp.dot(neigh.astype(jnp.bfloat16), w_n.astype(jnp.bfloat16),
                         preferred_element_type=jnp.float32))
        return jnp.maximum(out, 0.0) if relu else out

    ab = adj.astype(jnp.bfloat16)
    xb = x.astype(jnp.bfloat16)
    invd = 1.0 / jnp.maximum(jnp.sum(adj, axis=1, keepdims=True), 1.0)
    h_ref = ref_layer(xb, ab, invd, w_self0, w_neigh0, True).astype(jnp.bfloat16)
    e_ref = ref_layer(h_ref, ab, invd, w_self1, w_neigh1, False)
    f_ref = jnp.max(e_ref, axis=0, keepdims=True)

    tol = dict(rtol=3e-2, atol=3e-2)
    assert jnp.allclose(e, e_ref, **tol), float(jnp.max(jnp.abs(e - e_ref)))
    assert jnp.allclose(f, f_ref, **tol), float(jnp.max(jnp.abs(f - f_ref)))
    assert jnp.allclose(e_t, e_ref, **tol), float(jnp.max(jnp.abs(e_t - e_ref)))
    assert jnp.allclose(f_t, f_ref, **tol), float(jnp.max(jnp.abs(f_t - f_ref)))
    print("KERNEL_OK")
</pallas_src>

<mosaic_0001>
module attributes {stable_mosaic.version = 11 : i64} {
  func.func @_fused_encoder_kernel(%arg0: i32, %arg1: memref<256x256xi8, #tpu.memory_space<vmem>>, %arg2: memref<256x128xbf16, #tpu.memory_space<vmem>>, %arg3: memref<256x1xf32, #tpu.memory_space<vmem>>, %arg4: memref<256x1xf32, #tpu.memory_space<vmem>>, %arg5: memref<256x128xbf16, #tpu.memory_space<vmem>>, %arg6: memref<256x128xbf16, #tpu.memory_space<vmem>>, %arg7: memref<256x128xf32, #tpu.memory_space<vmem>>, %arg8: memref<1x128xf32, #tpu.memory_space<vmem>>) attributes {dimension_semantics = [#tpu.dimension_semantics<arbitrary>], iteration_bounds = array<i64: 1>, scalar_prefetch = 0 : i64, scratch_operands = 0 : i64, tpu.core_type = #tpu.core_type<tc>, window_params = [{pipeline_mode = #tpu.pipeline_mode<synchronous>, transform_indices = @transform_0, window_bounds = array<i64: 256, 256>}, {pipeline_mode = #tpu.pipeline_mode<synchronous>, transform_indices = @transform_1, window_bounds = array<i64: 256, 128>}, {pipeline_mode = #tpu.pipeline_mode<synchronous>, transform_indices = @transform_2, window_bounds = array<i64: 256, 1>}, {pipeline_mode = #tpu.pipeline_mode<synchronous>, transform_indices = @transform_3, window_bounds = array<i64: 256, 1>}, {pipeline_mode = #tpu.pipeline_mode<synchronous>, transform_indices = @transform_4, window_bounds = array<i64: 256, 128>}, {pipeline_mode = #tpu.pipeline_mode<synchronous>, transform_indices = @transform_5, window_bounds = array<i64: 256, 128>}, {pipeline_mode = #tpu.pipeline_mode<synchronous>, transform_indices = @transform_6, window_bounds = array<i64: 256, 128>}, {pipeline_mode = #tpu.pipeline_mode<synchronous>, transform_indices = @transform_7, window_bounds = array<i64: 1, 128>}]} {
    %c0 = arith.constant 0 : index
    %c0_0 = arith.constant 0 : index
    %0 = vector.load %arg1[%c0, %c0_0] : memref<256x256xi8, #tpu.memory_space<vmem>>, vector<256x256xi8>
    %1 = arith.sitofp %0 : vector<256x256xi8> to vector<256x256xf32>
    %2 = arith.truncf %1 : vector<256x256xf32> to vector<256x256xbf16>
    %c0_1 = arith.constant 0 : index
    %c0_2 = arith.constant 0 : index
    %3 = vector.load %arg2[%c0_1, %c0_2] : memref<256x128xbf16, #tpu.memory_space<vmem>>, vector<256x128xbf16>
    %c0_3 = arith.constant 0 : index
    %c0_4 = arith.constant 0 : index
    %4 = vector.load %arg3[%c0_3, %c0_4] : memref<256x1xf32, #tpu.memory_space<vmem>>, vector<256x1xf32>
    %cst = arith.constant dense<0.000000e+00> : vector<256x128xf32>
    %5 = tpu.matmul %2, %3, %cst {dimension_numbers = #tpu.dot_dimension_numbers<[1], [0], [0], [1], [0, 0, 1, 1], [], []>} : vector<256x256xbf16>, vector<256x128xbf16>, vector<256x128xf32> -> vector<256x128xf32>
    %6 = vector.broadcast %4 : vector<256x1xf32> to vector<256x128xf32>
    %7 = arith.mulf %5, %6 : vector<256x128xf32>
    %c0_5 = arith.constant 0 : index
    %c0_6 = arith.constant 0 : index
    %8 = vector.load %arg5[%c0_5, %c0_6] : memref<256x128xbf16, #tpu.memory_space<vmem>>, vector<128x128xbf16>
    %cst_7 = arith.constant dense<0.000000e+00> : vector<256x128xf32>
    %9 = tpu.matmul %3, %8, %cst_7 {dimension_numbers = #tpu.dot_dimension_numbers<[1], [0], [0], [1], [0, 0, 1, 1], [], []>} : vector<256x128xbf16>, vector<128x128xbf16>, vector<256x128xf32> -> vector<256x128xf32>
    %10 = arith.truncf %7 : vector<256x128xf32> to vector<256x128xbf16>
    %c128 = arith.constant 128 : index
    %c0_8 = arith.constant 0 : index
    %11 = vector.load %arg5[%c128, %c0_8] : memref<256x128xbf16, #tpu.memory_space<vmem>>, vector<128x128xbf16>
    %cst_9 = arith.constant dense<0.000000e+00> : vector<256x128xf32>
    %12 = tpu.matmul %10, %11, %cst_9 {dimension_numbers = #tpu.dot_dimension_numbers<[1], [0], [0], [1], [0, 0, 1, 1], [], []>} : vector<256x128xbf16>, vector<128x128xbf16>, vector<256x128xf32> -> vector<256x128xf32>
    %13 = arith.addf %9, %12 : vector<256x128xf32>
    %cst_10 = arith.constant 0.000000e+00 : f32
    %14 = vector.broadcast %cst_10 : f32 to vector<256x128xf32>
    %15 = arith.maximumf %13, %14 : vector<256x128xf32>
    %16 = arith.truncf %15 : vector<256x128xf32> to vector<256x128xbf16>
    %cst_11 = arith.constant dense<0.000000e+00> : vector<256x128xf32>
    %17 = tpu.matmul %2, %16, %cst_11 {dimension_numbers = #tpu.dot_dimension_numbers<[1], [0], [0], [1], [0, 0, 1, 1], [], []>} : vector<256x256xbf16>, vector<256x128xbf16>, vector<256x128xf32> -> vector<256x128xf32>
    %18 = vector.broadcast %4 : vector<256x1xf32> to vector<256x128xf32>
    %19 = arith.mulf %17, %18 : vector<256x128xf32>
    %c0_12 = arith.constant 0 : index
    %c0_13 = arith.constant 0 : index
    %20 = vector.load %arg6[%c0_12, %c0_13] : memref<256x128xbf16, #tpu.memory_space<vmem>>, vector<128x128xbf16>
    %cst_14 = arith.constant dense<0.000000e+00> : vector<256x128xf32>
    %21 = tpu.matmul %16, %20, %cst_14 {dimension_numbers = #tpu.dot_dimension_numbers<[1], [0], [0], [1], [0, 0, 1, 1], [], []>} : vector<256x128xbf16>, vector<128x128xbf16>, vector<256x128xf32> -> vector<256x128xf32>
    %22 = arith.truncf %19 : vector<256x128xf32> to vector<256x128xbf16>
    %c128_15 = arith.constant 128 : index
    %c0_16 = arith.constant 0 : index
    %23 = vector.load %arg6[%c128_15, %c0_16] : memref<256x128xbf16, #tpu.memory_space<vmem>>, vector<128x128xbf16>
    %cst_17 = arith.constant dense<0.000000e+00> : vector<256x128xf32>
    %24 = tpu.matmul %22, %23, %cst_17 {dimension_numbers = #tpu.dot_dimension_numbers<[1], [0], [0], [1], [0, 0, 1, 1], [], []>} : vector<256x128xbf16>, vector<128x128xbf16>, vector<256x128xf32> -> vector<256x128xf32>
    %25 = arith.addf %21, %24 : vector<256x128xf32>
    %c0_18 = arith.constant 0 : index
    %c0_19 = arith.constant 0 : index
    %26 = vector.load %arg7[%c0_18, %c0_19] : memref<256x128xf32, #tpu.memory_space<vmem>>, vector<256x128xf32>
    tpu.vector_store %arg7[%c0_18, %c0_19], %25 {strides = array<i32>} : memref<256x128xf32, #tpu.memory_space<vmem>>, vector<256x128xf32>,
    %c0_20 = arith.constant 0 : index
    %c0_21 = arith.constant 0 : index
    %27 = vector.load %arg4[%c0_20, %c0_21] : memref<256x1xf32, #tpu.memory_space<vmem>>, vector<256x1xf32>
    %cst_22 = arith.constant 5.000000e-01 : f32
    %28 = vector.broadcast %cst_22 : f32 to vector<256x1xf32>
    %29 = arith.cmpf ogt, %27, %28 : vector<256x1xf32>
    %cst_23 = arith.constant 0xFF800000 : f32
    %30 = vector.shape_cast %29 : vector<256x1xi1> to vector<256x1xi1>
    %31 = vector.broadcast %30 : vector<256x1xi1> to vector<256x128xi1>
    %32 = vector.broadcast %cst_23 : f32 to vector<256x128xf32>
    %33 = arith.select %31, %25, %32 : vector<256x128xi1>, vector<256x128xf32>
    %cst_24 = arith.constant dense<0xFF800000> : vector<128xf32>
    %34 = vector.multi_reduction <maximumf>, %33, %cst_24 [0] : vector<256x128xf32> to vector<128xf32>
    %35 = vector.shape_cast %34 : vector<128xf32> to vector<1x128xf32>
    %c0_25 = arith.constant 0 : index
    %c0_26 = arith.constant 0 : index
    %36 = vector.load %arg8[%c0_25, %c0_26] : memref<1x128xf32, #tpu.memory_space<vmem>>, vector<1x128xf32>
    tpu.vector_store %arg8[%c0_25, %c0_26], %35 {strides = array<i32>} : memref<1x128xf32, #tpu.memory_space<vmem>>, vector<1x128xf32>,
    return
  }
  func.func @transform_0(%arg0: i32) -> (i32, i32) {
    %c0_i32 = arith.constant 0 : i32
    %c0_i32_0 = arith.constant 0 : i32
    %c0_i32_1 = arith.constant 0 : i32
    return %c0_i32, %c0_i32_0 : i32, i32
  }
  func.func @transform_1(%arg0: i32) -> (i32, i32) {
    %c0_i32 = arith.constant 0 : i32
    %c0_i32_0 = arith.constant 0 : i32
    %c0_i32_1 = arith.constant 0 : i32
    return %c0_i32, %c0_i32_0 : i32, i32
  }
  func.func @transform_2(%arg0: i32) -> (i32, i32) {
    %c0_i32 = arith.constant 0 : i32
    %c0_i32_0 = arith.constant 0 : i32
    %c0_i32_1 = arith.constant 0 : i32
    return %c0_i32, %c0_i32_0 : i32, i32
  }
  func.func @transform_3(%arg0: i32) -> (i32, i32) {
    %c0_i32 = arith.constant 0 : i32
    %c0_i32_0 = arith.constant 0 : i32
    %c0_i32_1 = arith.constant 0 : i32
    return %c0_i32, %c0_i32_0 : i32, i32
  }
  func.func @transform_4(%arg0: i32) -> (i32, i32) {
    %c0_i32 = arith.constant 0 : i32
    %c0_i32_0 = arith.constant 0 : i32
    %c0_i32_1 = arith.constant 0 : i32
    return %c0_i32, %c0_i32_0 : i32, i32
  }
  func.func @transform_5(%arg0: i32) -> (i32, i32) {
    %c0_i32 = arith.constant 0 : i32
    %c0_i32_0 = arith.constant 0 : i32
    %c0_i32_1 = arith.constant 0 : i32
    return %c0_i32, %c0_i32_0 : i32, i32
  }
  func.func @transform_6(%arg0: i32) -> (i32, i32) {
    %c0_i32 = arith.constant 0 : i32
    %c0_i32_0 = arith.constant 0 : i32
    %c0_i32_1 = arith.constant 0 : i32
    return %c0_i32, %c0_i32_0 : i32, i32
  }
  func.func @transform_7(%arg0: i32) -> (i32, i32) {
    %c0_i32 = arith.constant 0 : i32
    %c0_i32_0 = arith.constant 0 : i32
    %c0_i32_1 = arith.constant 0 : i32
    return %c0_i32, %c0_i32_0 : i32, i32
  }
}

</mosaic_0001>

<llo_original>
// kernel: sage_encoder_forward.1
$region0: #{sage_encoder_forward.1}
  #allocation0 [shape = 'u32[]', space=smem, size = 0x4, offset = 0x4, fixed_abs, tag = 'smem constant byte address 0x4 - core index']
  #allocation1 [shape = 'u32[144,128]{1,0:T(1,128)}', space=vmem, size = 0x12000, scoped, tag = 'internal scratch']
  %s0 = inlined_call_operand.vmem [shape: s8[256,256], index: 0, kind: input, shape index: {}]
  %s1 = inlined_call_operand.vmem [shape: bf16[256,128], index: 1, kind: input, shape index: {}]
  %s2 = inlined_call_operand.vmem [shape: f32[256,1], index: 2, kind: input, shape index: {}]
  %s3 = inlined_call_operand.vmem [shape: f32[256,1], index: 3, kind: input, shape index: {}]
  %s4 = inlined_call_operand.vmem [shape: bf16[256,128], index: 4, kind: input, shape index: {}]
  %s5 = inlined_call_operand.vmem [shape: bf16[256,128], index: 5, kind: input, shape index: {}]
  %s6 = inlined_call_operand.vmem [shape: f32[256,128], index: 6, kind: output, shape index: {0}]
  %s7 = inlined_call_operand.hbm [shape: f32[1,128], index: 7, kind: output, shape index: {1}]
  %8 = xla_tuple %s6, %s7
  %s9 = sld [smem:[#allocation0]]
  $region42: #{sage_encoder_forward.1} parent=0
    _
  %s11 = ssub.s32 1, %s9
  %s12 = scalar_select 0, %s11, %s9
  $region1: #{sage_encoder_forward.1} parent=0
    #allocation2 [shape = 'u8[512]{0}', space=vmem, size = 0x400, scoped, tag = 'output window, operand 1, single buffered']
    #allocation3 [shape = 's32[1]{0}', space=sflag, size = 0x4, scoped, tag = 'scoped memory for sage_encoder_forward.1']
    %13 = vsyncpa [#allocation3], 0
    // Predicated region
    $region2: #{sage_encoder_forward.1} parent=1 // pred_check
      _
    $region3: #{sage_encoder_forward.1} parent=1 // pred_check_branch
      %15 = sbr.rel (0) target = $region5
    $region4: #{sage_encoder_forward.1} parent=1 // pred_region
      _
    $region5: #{sage_encoder_forward.1} parent=1 // pred_fallthru
      _
    // Predicated region
    $region6: #{sage_encoder_forward.1} parent=1 // pred_check
      _
    $region7: #{sage_encoder_forward.1} parent=1 // pred_check_branch
      %17 = sbr.rel (0) target = $region9
    $region8: #{sage_encoder_forward.1} parent=1 // pred_region
      _
    $region9: #{sage_encoder_forward.1} parent=1 // pred_fallthru
      _
    // Predicated region
    $region10: #{sage_encoder_forward.1} parent=1 // pred_check
      _
    $region11: #{sage_encoder_forward.1} parent=1 // pred_check_branch
      %19 = sbr.rel (0) target = $region13
    $region12: #{sage_encoder_forward.1} parent=1 // pred_region
      _
    $region13: #{sage_encoder_forward.1} parent=1 // pred_fallthru
      _
    // Predicated region
    $region14: #{sage_encoder_forward.1} parent=1 // pred_check
      _
    $region15: #{sage_encoder_forward.1} parent=1 // pred_check_branch
      %21 = sbr.rel (0) target = $region17
    $region16: #{sage_encoder_forward.1} parent=1 // pred_region
      _
    $region17: #{sage_encoder_forward.1} parent=1 // pred_fallthru
      _
    // Predicated region
    $region18: #{sage_encoder_forward.1} parent=1 // pred_check
      _
    $region19: #{sage_encoder_forward.1} parent=1 // pred_check_branch
      %23 = sbr.rel (0) target = $region21
    $region20: #{sage_encoder_forward.1} parent=1 // pred_region
      _
    $region21: #{sage_encoder_forward.1} parent=1 // pred_fallthru
      _
    // Predicated region
    $region22: #{sage_encoder_forward.1} parent=1 // pred_check
      _
    $region23: #{sage_encoder_forward.1} parent=1 // pred_check_branch
      %25 = sbr.rel (0) target = $region25
    $region24: #{sage_encoder_forward.1} parent=1 // pred_region
      _
    $region25: #{sage_encoder_forward.1} parent=1 // pred_fallthru
      _
    %v27 = vld [vmem:[%s0] sm:$0xff]
    %v28 = vld [vmem:[%s0 + $0x8] sm:$0xff]
    %v29 = vld [vmem:[%s0 + $0x10] sm:$0xff]
    %v30 = vld [vmem:[%s0 + $0x18] sm:$0xff]
    %v31 = vld [vmem:[%s0 + $0x20] sm:$0xff]
    %v32 = vld [vmem:[%s0 + $0x28] sm:$0xff]
    %v33 = vld [vmem:[%s0 + $0x30] sm:$0xff]
    %v34 = vld [vmem:[%s0 + $0x38] sm:$0xff]
    %v35 = vld [vmem:[%s0 + $0x40] sm:$0xff]
    %v36 = vld [vmem:[%s0 + $0x48] sm:$0xff]
    %v37 = vld [vmem:[%s0 + $0x50] sm:$0xff]
    %v38 = vld [vmem:[%s0 + $0x58] sm:$0xff]
    %v39 = vld [vmem:[%s0 + $0x60] sm:$0xff]
    %v40 = vld [vmem:[%s0 + $0x68] sm:$0xff]
    %v41 = vld [vmem:[%s0 + $0x70] sm:$0xff]
    %v42 = vld [vmem:[%s0 + $0x78] sm:$0xff]
    %v43 = vunpack.c.l.s8.bf16 %v27
    %v44 = vunpack.c.l.s8.bf16 %v28
    %v45 = vunpack.c.h.s8.bf16 %v27
    %v46 = vunpack.c.h.s8.bf16 %v28
    %v47 = vunpack.c.l.s8.bf16 %v29
    %v48 = vunpack.c.l.s8.bf16 %v30
    %v49 = vunpack.c.h.s8.bf16 %v29
    %v50 = vunpack.c.h.s8.bf16 %v30
    %v51 = vunpack.c.l.s8.bf16 %v31
    %v52 = vunpack.c.l.s8.bf16 %v32
    %v53 = vunpack.c.h.s8.bf16 %v31
    %v54 = vunpack.c.h.s8.bf16 %v32
    %v55 = vunpack.c.l.s8.bf16 %v33
    %v56 = vunpack.c.l.s8.bf16 %v34
    %v57 = vunpack.c.h.s8.bf16 %v33
    %v58 = vunpack.c.h.s8.bf16 %v34
    %v59 = vunpack.c.l.s8.bf16 %v35
    %v60 = vunpack.c.l.s8.bf16 %v36
    %v61 = vunpack.c.h.s8.bf16 %v35
    %v62 = vunpack.c.h.s8.bf16 %v36
    %v63 = vunpack.c.l.s8.bf16 %v37
    %v64 = vunpack.c.l.s8.bf16 %v38
    %v65 = vunpack.c.h.s8.bf16 %v37
    %v66 = vunpack.c.h.s8.bf16 %v38
    %v67 = vunpack.c.l.s8.bf16 %v39
    %v68 = vunpack.c.l.s8.bf16 %v40
    %v69 = vunpack.c.h.s8.bf16 %v39
    %v70 = vunpack.c.h.s8.bf16 %v40
    %v71 = vunpack.c.l.s8.bf16 %v41
    %v72 = vunpack.c.l.s8.bf16 %v42
    %v73 = vunpack.c.h.s8.bf16 %v41
    %v74 = vunpack.c.h.s8.bf16 %v42
    %v75 = vld [vmem:[%s1] sm:$0xf]
    %v76 = vld [vmem:[%s1 + $0x4] sm:$0xf]
    %v77 = vld [vmem:[%s1 + $0x8] sm:$0xf]
    %v78 = vld [vmem:[%s1 + $0xc] sm:$0xf]
    %v79 = vld [vmem:[%s1 + $0x10] sm:$0xf]
    %v80 = vld [vmem:[%s1 + $0x14] sm:$0xf]
    %v81 = vld [vmem:[%s1 + $0x18] sm:$0xf]
    %v82 = vld [vmem:[%s1 + $0x1c] sm:$0xf]
    %v83 = vld [vmem:[%s1 + $0x20] sm:$0xf]
    %v84 = vld [vmem:[%s1 + $0x24] sm:$0xf]
    %v85 = vld [vmem:[%s1 + $0x28] sm:$0xf]
    %v86 = vld [vmem:[%s1 + $0x2c] sm:$0xf]
    %v87 = vld [vmem:[%s1 + $0x30] sm:$0xf]
    %v88 = vld [vmem:[%s1 + $0x34] sm:$0xf]
    %v89 = vld [vmem:[%s1 + $0x38] sm:$0xf]
    %v90 = vld [vmem:[%s1 + $0x3c] sm:$0xf]
    %v91 = vld [vmem:[%s1 + $0x40] sm:$0xf]
    %v92 = vld [vmem:[%s1 + $0x44] sm:$0xf]
    %v93 = vld [vmem:[%s1 + $0x48] sm:$0xf]
    %v94 = vld [vmem:[%s1 + $0x4c] sm:$0xf]
    %v95 = vld [vmem:[%s1 + $0x50] sm:$0xf]
    %v96 = vld [vmem:[%s1 + $0x54] sm:$0xf]
    %v97 = vld [vmem:[%s1 + $0x58] sm:$0xf]
    %v98 = vld [vmem:[%s1 + $0x5c] sm:$0xf]
    %v99 = vld [vmem:[%s1 + $0x60] sm:$0xf]
    %v100 = vld [vmem:[%s1 + $0x64] sm:$0xf]
    %v101 = vld [vmem:[%s1 + $0x68] sm:$0xf]
    %v102 = vld [vmem:[%s1 + $0x6c] sm:$0xf]
    %v103 = vld [vmem:[%s1 + $0x70] sm:$0xf]
    %v104 = vld [vmem:[%s1 + $0x74] sm:$0xf]
    %v105 = vld [vmem:[%s1 + $0x78] sm:$0xf]
    %v106 = vld [vmem:[%s1 + $0x7c] sm:$0xf]
    %v107 = vld [vmem:[%s2] sm:$0xff]
    %v108 = vld [vmem:[%s2 + $0x8] sm:$0xff]
    %v109 = vld [vmem:[%s2 + $0x10] sm:$0xff]
    %v110 = vld [vmem:[%s2 + $0x18] sm:$0xff]
    %v111 = vld [vmem:[%s2 + $0x20] sm:$0xff]
    %v112 = vld [vmem:[%s2 + $0x28] sm:$0xff]
    %v113 = vld [vmem:[%s2 + $0x30] sm:$0xff]
    %v114 = vld [vmem:[%s2 + $0x38] sm:$0xff]
    %v115 = vld [vmem:[%s2 + $0x40] sm:$0xff]
    %v116 = vld [vmem:[%s2 + $0x48] sm:$0xff]
    %v117 = vld [vmem:[%s2 + $0x50] sm:$0xff]
    %v118 = vld [vmem:[%s2 + $0x58] sm:$0xff]
    %v119 = vld [vmem:[%s2 + $0x60] sm:$0xff]
    %v120 = vld [vmem:[%s2 + $0x68] sm:$0xff]
    %v121 = vld [vmem:[%s2 + $0x70] sm:$0xff]
    %v122 = vld [vmem:[%s2 + $0x78] sm:$0xff]
    %v123 = vld [vmem:[%s2 + $0x80] sm:$0xff]
    %v124 = vld [vmem:[%s2 + $0x88] sm:$0xff]
    %v125 = vld [vmem:[%s2 + $0x90] sm:$0xff]
    %v126 = vld [vmem:[%s2 + $0x98] sm:$0xff]
    %v127 = vld [vmem:[%s2 + $0xa0] sm:$0xff]
    %v128 = vld [vmem:[%s2 + $0xa8] sm:$0xff]
    %v129 = vld [vmem:[%s2 + $0xb0] sm:$0xff]
    %v130 = vld [vmem:[%s2 + $0xb8] sm:$0xff]
    %v131 = vld [vmem:[%s2 + $0xc0] sm:$0xff]
    %v132 = vld [vmem:[%s2 + $0xc8] sm:$0xff]
    %v133 = vld [vmem:[%s2 + $0xd0] sm:$0xff]
    %v134 = vld [vmem:[%s2 + $0xd8] sm:$0xff]
    %v135 = vld [vmem:[%s2 + $0xe0] sm:$0xff]
    %v136 = vld [vmem:[%s2 + $0xe8] sm:$0xff]
    %v137 = vld [vmem:[%s2 + $0xf0] sm:$0xff]
    %v138 = vld [vmem:[%s2 + $0xf8] sm:$0xff]
    %v171 = vunpack.c.l.b16 %v75
    %v172 = vunpack.c.l.b16 %v76
    %v173 = vunpack.c.l.b16 %v77
    %v174 = vunpack.c.l.b16 %v78
    %v175 = vunpack.c.l.b16 %v79
    %v176 = vunpack.c.l.b16 %v80
    %v177 = vunpack.c.l.b16 %v81
    %v178 = vunpack.c.l.b16 %v82
    %v179 = vunpack.c.l.b16 %v83
    %v180 = vunpack.c.l.b16 %v84
    %v181 = vunpack.c.l.b16 %v85
    %v182 = vunpack.c.l.b16 %v86
    %v183 = vunpack.c.l.b16 %v87
    %v184 = vunpack.c.l.b16 %v88
    %v185 = vunpack.c.l.b16 %v89
    %v186 = vunpack.c.l.b16 %v90
    %v187 = vunpack.c.l.b16 %v91
    %v188 = vunpack.c.l.b16 %v92
    %v189 = vunpack.c.l.b16 %v93
    %v190 = vunpack.c.l.b16 %v94
    %v191 = vunpack.c.l.b16 %v95
    %v192 = vunpack.c.l.b16 %v96
    %v193 = vunpack.c.l.b16 %v97
    %v194 = vunpack.c.l.b16 %v98
    %v195 = vunpack.c.l.b16 %v99
    %v196 = vunpack.c.l.b16 %v100
    %v197 = vunpack.c.l.b16 %v101
    %v198 = vunpack.c.l.b16 %v102
    %v199 = vunpack.c.l.b16 %v103
    %v200 = vunpack.c.l.b16 %v104
    %v201 = vunpack.c.l.b16 %v105
    %v202 = vunpack.c.l.b16 %v106
    %v203 = vpack.c.b16 %v172, %v171
    %v204 = vpack.c.b16 %v174, %v173
    %v205 = vpack.c.b16 %v176, %v175
    %v206 = vpack.c.b16 %v178, %v177
    %v207 = vpack.c.b16 %v180, %v179
    %v208 = vpack.c.b16 %v182, %v181
    %v209 = vpack.c.b16 %v184, %v183
    %v210 = vpack.c.b16 %v186, %v185
    %v211 = vpack.c.b16 %v188, %v187
    %v212 = vpack.c.b16 %v190, %v189
    %v213 = vpack.c.b16 %v192, %v191
    %v214 = vpack.c.b16 %v194, %v193
    %v215 = vpack.c.b16 %v196, %v195
    %v216 = vpack.c.b16 %v198, %v197
    %v217 = vpack.c.b16 %v200, %v199
    %v218 = vpack.c.b16 %v202, %v201
    %235 = vmatprep.subr.bf16.mxu0 0
    %236 = vmatpush1.bf16.msra.mxu0 %v203
    %237 = vmatprep.subr.bf16.mxu0 0
    %238 = vmatpush1.bf16.msra.mxu0 %v204
    %239 = vmatprep.subr.bf16.mxu0 0
    %240 = vmatpush1.bf16.msra.mxu0 %v205
    %241 = vmatprep.subr.bf16.mxu0 0
    %242 = vmatpush1.bf16.msra.mxu0 %v206
    %243 = vmatprep.subr.bf16.mxu0 0
    %244 = vmatpush1.bf16.msra.mxu0 %v207
    %245 = vmatprep.subr.bf16.mxu0 0
    %246 = vmatpush1.bf16.msra.mxu0 %v208
    %247 = vmatprep.subr.bf16.mxu0 0
    %248 = vmatpush1.bf16.msra.mxu0 %v209
    %249 = vmatprep.subr.bf16.mxu0 0
    %250 = vmatpush1.bf16.msra.mxu0 %v210
    %251 = vmatprep.subr.bf16.mxu0 0
    %252 = vmatpush1.bf16.msra.mxu0 %v211
    %253 = vmatprep.subr.bf16.mxu0 0
    %254 = vmatpush1.bf16.msra.mxu0 %v212
    %255 = vmatprep.subr.bf16.mxu0 0
    %256 = vmatpush1.bf16.msra.mxu0 %v213
    %257 = vmatprep.subr.bf16.mxu0 0
    %258 = vmatpush1.bf16.msra.mxu0 %v214
    %259 = vmatprep.subr.bf16.mxu0 0
    %260 = vmatpush1.bf16.msra.mxu0 %v215
    %261 = vmatprep.subr.bf16.mxu0 0
    %262 = vmatpush1.bf16.msra.mxu0 %v216
    %263 = vmatprep.subr.bf16.mxu0 0
    %264 = vmatpush1.bf16.msra.mxu0 %v217
    %265 = vmatprep.subr.bf16.mxu0 0
    %266 = vmatpush1.bf16.msra.mxu0 %v218
    %267 = vmatprep.mubr.bf16.mxu0 %v44
    %268 = vmatmul.mubr.bf16.gmra.mrb[0].mxu0 %v43
    %v269 = vpop.f32.mrb[0].mxu0
    %v270 = vadd.f32 0.0, %v269
    %v271 = vpop.f32.mrb[0].mxu0
    %v272 = vpop.f32.mrb[0].mxu0
    %v273 = vadd.f32 0.0, %v272
    %v274 = vpop.f32.mrb[0].mxu0
    %275 = vmatprep.mubr.bf16.mxu0 %v46
    %276 = vmatmul.mubr.bf16.gmra.mrb[0].mxu0 %v45
    %v277 = vpop.f32.mrb[0].mxu0
    %v278 = vadd.f32 0.0, %v277
    %v279 = vpop.f32.mrb[0].mxu0
    %v280 = vpop.f32.mrb[0].mxu0
    %v281 = vadd.f32 0.0, %v280
    %v282 = vpop.f32.mrb[0].mxu0
    %283 = vmatprep.mubr.bf16.mxu0 %v48
    %284 = vmatmul.mubr.bf16.gmra.mrb[0].mxu0 %v47
    %v285 = vpop.f32.mrb[0].mxu0
    %v286 = vadd.f32 0.0, %v285
    %v287 = vpop.f32.mrb[0].mxu0
    %v288 = vpop.f32.mrb[0].mxu0
    %v289 = vadd.f32 0.0, %v288
    %v290 = vpop.f32.mrb[0].mxu0
    %291 = vmatprep.mubr.bf16.mxu0 %v50
    %292 = vmatmul.mubr.bf16.gmra.mrb[0].mxu0 %v49
    %v293 = vpop.f32.mrb[0].mxu0
    %v294 = vadd.f32 0.0, %v293
    %v295 = vpop.f32.mrb[0].mxu0
    %v296 = vpop.f32.mrb[0].mxu0
    %v297 = vadd.f32 0.0, %v296
    %v298 = vpop.f32.mrb[0].mxu0
    %299 = vmatprep.mubr.bf16.mxu0 %v52
    %300 = vmatmul.mubr.bf16.gmra.mrb[0].mxu0 %v51
    %v301 = vpop.f32.mrb[0].mxu0
    %v302 = vadd.f32 0.0, %v301
    %v303 = vpop.f32.mrb[0].mxu0
    %v304 = vpop.f32.mrb[0].mxu0
    %v305 = vadd.f32 0.0, %v304
    %v306 = vpop.f32.mrb[0].mxu0
    %307 = vmatprep.mubr.bf16.mxu0 %v54
    %308 = vmatmul.mubr.bf16.gmra.mrb[0].mxu0 %v53
    %v309 = vpop.f32.mrb[0].mxu0
    %v310 = vadd.f32 0.0, %v309
    %v311 = vpop.f32.mrb[0].mxu0
    %v312 = vpop.f32.mrb[0].mxu0
    %v313 = vadd.f32 0.0, %v312
    %v314 = vpop.f32.mrb[0].mxu0
    %315 = vmatprep.mubr.bf16.mxu0 %v56
    %316 = vmatmul.mubr.bf16.gmra.mrb[0].mxu0 %v55
    %v317 = vpop.f32.mrb[0].mxu0
    %v318 = vadd.f32 0.0, %v317
    %v319 = vpop.f32.mrb[0].mxu0
    %v320 = vpop.f32.mrb[0].mxu0
    %v321 = vadd.f32 0.0, %v320
    %v322 = vpop.f32.mrb[0].mxu0
    %323 = vmatprep.mubr.bf16.mxu0 %v58
    %324 = vmatmul.mubr.bf16.gmra.mrb[0].mxu0 %v57
    %v325 = vpop.f32.mrb[0].mxu0
    %v326 = vadd.f32 0.0, %v325
    %v327 = vpop.f32.mrb[0].mxu0
    %v328 = vpop.f32.mrb[0].mxu0
    %v329 = vadd.f32 0.0, %v328
    %v330 = vpop.f32.mrb[0].mxu0
    %331 = vmatprep.mubr.bf16.mxu0 %v60
    %332 = vmatmul.mubr.bf16.gmra.mrb[0].mxu0 %v59
    %v333 = vpop.f32.mrb[0].mxu0
    %v334 = vadd.f32 0.0, %v333
    %v335 = vpop.f32.mrb[0].mxu0
    %v336 = vpop.f32.mrb[0].mxu0
    %v337 = vadd.f32 0.0, %v336
    %v338 = vpop.f32.mrb[0].mxu0
    %339 = vmatprep.mubr.bf16.mxu0 %v62
    %340 = vmatmul.mubr.bf16.gmra.mrb[0].mxu0 %v61
    %v341 = vpop.f32.mrb[0].mxu0
    %v342 = vadd.f32 0.0, %v341
    %v343 = vpop.f32.mrb[0].mxu0
    %v344 = vpop.f32.mrb[0].mxu0
    %v345 = vadd.f32 0.0, %v344
    %v346 = vpop.f32.mrb[0].mxu0
    %347 = vmatprep.mubr.bf16.mxu0 %v64
    %348 = vmatmul.mubr.bf16.gmra.mrb[0].mxu0 %v63
    %v349 = vpop.f32.mrb[0].mxu0
    %v350 = vadd.f32 0.0, %v349
    %v351 = vpop.f32.mrb[0].mxu0
    %v352 = vpop.f32.mrb[0].mxu0
    %v353 = vadd.f32 0.0, %v352
    %v354 = vpop.f32.mrb[0].mxu0
    %355 = vmatprep.mubr.bf16.mxu0 %v66
    %356 = vmatmul.mubr.bf16.gmra.mrb[0].mxu0 %v65
    %v357 = vpop.f32.mrb[0].mxu0
    %v358 = vadd.f32 0.0, %v357
    %v359 = vpop.f32.mrb[0].mxu0
    %v360 = vpop.f32.mrb[0].mxu0
    %v361 = vadd.f32 0.0, %v360
    %v362 = vpop.f32.mrb[0].mxu0
    %363 = vmatprep.mubr.bf16.mxu0 %v68
    %364 = vmatmul.mubr.bf16.gmra.mrb[0].mxu0 %v67
    %v365 = vpop.f32.mrb[0].mxu0
    %v366 = vadd.f32 0.0, %v365
    %v367 = vpop.f32.mrb[0].mxu0
    %v368 = vpop.f32.mrb[0].mxu0
    %v369 = vadd.f32 0.0, %v368
    %v370 = vpop.f32.mrb[0].mxu0
    %371 = vmatprep.mubr.bf16.mxu0 %v70
    %372 = vmatmul.mubr.bf16.gmra.mrb[0].mxu0 %v69
    %v373 = vpop.f32.mrb[0].mxu0
    %v374 = vadd.f32 0.0, %v373
    %v375 = vpop.f32.mrb[0].mxu0
    %v376 = vpop.f32.mrb[0].mxu0
    %v377 = vadd.f32 0.0, %v376
    %v378 = vpop.f32.mrb[0].mxu0
    %379 = vmatprep.mubr.bf16.mxu0 %v72
    %380 = vmatmul.mubr.bf16.gmra.mrb[0].mxu0 %v71
    %v381 = vpop.f32.mrb[0].mxu0
    %v382 = vadd.f32 0.0, %v381
    %v383 = vpop.f32.mrb[0].mxu0
    %v384 = vpop.f32.mrb[0].mxu0
    %v385 = vadd.f32 0.0, %v384
    %v386 = vpop.f32.mrb[0].mxu0
    %387 = vmatprep.mubr.bf16.mxu0 %v74
    %388 = vmatmul.mubr.bf16.gmra.mrb[0].mxu0 %v73
    %v389 = vpop.f32.mrb[0].mxu0
    %v390 = vadd.f32 0.0, %v389
    %v391 = vpop.f32.mrb[0].mxu0
    %v392 = vpop.f32.mrb[0].mxu0
    %v393 = vadd.f32 0.0, %v392
    %v394 = vpop.f32.mrb[0].mxu0
    %395 = vdwg.mxu0
    %397 = vset.pattern.permute.xlu0 0
    %398 = vperm.xlu0 %397, %v107
    %v399 = vpop.permute.xlu0 %398
    %402 = vset.pattern.permute.xlu0 0
    %403 = vperm.xlu0 %402, %v108
    %v404 = vpop.permute.xlu0 %403
    %407 = vset.pattern.permute.xlu0 0
    %408 = vperm.xlu0 %407, %v109
    %v409 = vpop.permute.xlu0 %408
    %412 = vset.pattern.permute.xlu0 0
    %413 = vperm.xlu0 %412, %v110
    %v414 = vpop.permute.xlu0 %413
    %417 = vset.pattern.permute.xlu0 0
    %418 = vperm.xlu0 %417, %v111
    %v419 = vpop.permute.xlu0 %418
    %422 = vset.pattern.permute.xlu0 0
    %423 = vperm.xlu0 %422, %v112
    %v424 = vpop.permute.xlu0 %423
    %427 = vset.pattern.permute.xlu0 0
    %428 = vperm.xlu0 %427, %v113
    %v429 = vpop.permute.xlu0 %428
    %432 = vset.pattern.permute.xlu0 0
    %433 = vperm.xlu0 %432, %v114
    %v434 = vpop.permute.xlu0 %433
    %437 = vset.pattern.permute.xlu0 0
    %438 = vperm.xlu0 %437, %v115
    %v439 = vpop.permute.xlu0 %438
    %442 = vset.pattern.permute.xlu0 0
    %443 = vperm.xlu0 %442, %v116
    %v444 = vpop.permute.xlu0 %443
    %447 = vset.pattern.permute.xlu0 0
    %448 = vperm.xlu0 %447, %v117
    %v449 = vpop.permute.xlu0 %448
    %452 = vset.pattern.permute.xlu0 0
    %453 = vperm.xlu0 %452, %v118
    %v454 = vpop.permute.xlu0 %453
    %457 = vset.pattern.permute.xlu0 0
    %458 = vperm.xlu0 %457, %v119
    %v459 = vpop.permute.xlu0 %458
    %462 = vset.pattern.permute.xlu0 0
    %463 = vperm.xlu0 %462, %v120
    %v464 = vpop.permute.xlu0 %463
    %467 = vset.pattern.permute.xlu0 0
    %468 = vperm.xlu0 %467, %v121
    %v469 = vpop.permute.xlu0 %468
    %472 = vset.pattern.permute.xlu0 0
    %473 = vperm.xlu0 %472, %v122
    %v474 = vpop.permute.xlu0 %473
    %477 = vset.pattern.permute.xlu0 0
    %478 = vperm.xlu0 %477, %v123
    %v479 = vpop.permute.xlu0 %478
    %482 = vset.pattern.permute.xlu0 0
    %483 = vperm.xlu0 %482, %v124
    %v484 = vpop.permute.xlu0 %483
    %487 = vset.pattern.permute.xlu0 0
    %488 = vperm.xlu0 %487, %v125
    %v489 = vpop.permute.xlu0 %488
    %492 = vset.pattern.permute.xlu0 0
    %493 = vperm.xlu0 %492, %v126
    %v494 = vpop.permute.xlu0 %493
    %497 = vset.pattern.permute.xlu0 0
    %498 = vperm.xlu0 %497, %v127
    %v499 = vpop.permute.xlu0 %498
    %502 = vset.pattern.permute.xlu0 0
    %503 = vperm.xlu0 %502, %v128
    %v504 = vpop.permute.xlu0 %503
    %507 = vset.pattern.permute.xlu0 0
    %508 = vperm.xlu0 %507, %v129
    %v509 = vpop.permute.xlu0 %508
    %512 = vset.pattern.permute.xlu0 0
    %513 = vperm.xlu0 %512, %v130
    %v514 = vpop.permute.xlu0 %513
    %517 = vset.pattern.permute.xlu0 0
    %518 = vperm.xlu0 %517, %v131
    %v519 = vpop.permute.xlu0 %518
    %522 = vset.pattern.permute.xlu0 0
    %523 = vperm.xlu0 %522, %v132
    %v524 = vpop.permute.xlu0 %523
    %527 = vset.pattern.permute.xlu0 0
    %528 = vperm.xlu0 %527, %v133
    %v529 = vpop.permute.xlu0 %528
    %532 = vset.pattern.permute.xlu0 0
    %533 = vperm.xlu0 %532, %v134
    %v534 = vpop.permute.xlu0 %533
    %537 = vset.pattern.permute.xlu0 0
    %538 = vperm.xlu0 %537, %v135
    %v539 = vpop.permute.xlu0 %538
    %542 = vset.pattern.permute.xlu0 0
    %543 = vperm.xlu0 %542, %v136
    %v544 = vpop.permute.xlu0 %543
    %547 = vset.pattern.permute.xlu0 0
    %548 = vperm.xlu0 %547, %v137
    %v549 = vpop.permute.xlu0 %548
    %552 = vset.pattern.permute.xlu0 0
    %553 = vperm.xlu0 %552, %v138
    %v554 = vpop.permute.xlu0 %553
    %v556 = vmul.f32 %v270, %v399
    %v557 = vmul.f32 %v273, %v404
    %v558 = vmul.f32 %v278, %v409
    %v559 = vmul.f32 %v281, %v414
    %v560 = vmul.f32 %v286, %v419
    %v561 = vmul.f32 %v289, %v424
    %v562 = vmul.f32 %v294, %v429
    %v563 = vmul.f32 %v297, %v434
    %v564 = vmul.f32 %v302, %v439
    %v565 = vmul.f32 %v305, %v444
    %v566 = vmul.f32 %v310, %v449
    %v567 = vmul.f32 %v313, %v454
    %v568 = vmul.f32 %v318, %v459
    %v569 = vmul.f32 %v321, %v464
    %v570 = vmul.f32 %v326, %v469
    %v571 = vmul.f32 %v329, %v474
    %v572 = vmul.f32 %v334, %v479
    %v573 = vmul.f32 %v337, %v484
    %v574 = vmul.f32 %v342, %v489
    %v575 = vmul.f32 %v345, %v494
    %v576 = vmul.f32 %v350, %v499
    %v577 = vmul.f32 %v353, %v504
    %v578 = vmul.f32 %v358, %v509
    %v579 = vmul.f32 %v361, %v514
    %v580 = vmul.f32 %v366, %v519
    %v581 = vmul.f32 %v369, %v524
    %v582 = vmul.f32 %v374, %v529
    %v583 = vmul.f32 %v377, %v534
    %v584 = vmul.f32 %v382, %v539
    %v585 = vmul.f32 %v385, %v544
    %v586 = vmul.f32 %v390, %v549
    %v587 = vmul.f32 %v393, %v554
    %v588 = vld [vmem:[%s4] sm:$0xf]
    %v589 = vld [vmem:[%s4 + $0x4] sm:$0xf]
    %v590 = vld [vmem:[%s4 + $0x8] sm:$0xf]
    %v591 = vld [vmem:[%s4 + $0xc] sm:$0xf]
    %v592 = vld [vmem:[%s4 + $0x10] sm:$0xf]
    %v593 = vld [vmem:[%s4 + $0x14] sm:$0xf]
    %v594 = vld [vmem:[%s4 + $0x18] sm:$0xf]
    %v595 = vld [vmem:[%s4 + $0x1c] sm:$0xf]
    %v596 = vld [vmem:[%s4 + $0x20] sm:$0xf]
    %v597 = vld [vmem:[%s4 + $0x24] sm:$0xf]
    %v598 = vld [vmem:[%s4 + $0x28] sm:$0xf]
    %v599 = vld [vmem:[%s4 + $0x2c] sm:$0xf]
    %v600 = vld [vmem:[%s4 + $0x30] sm:$0xf]
    %v601 = vld [vmem:[%s4 + $0x34] sm:$0xf]
    %v602 = vld [vmem:[%s4 + $0x38] sm:$0xf]
    %v603 = vld [vmem:[%s4 + $0x3c] sm:$0xf]
    %v604 = vpack.c.bf16 %v557, %v556
    %v605 = vpack.c.bf16 %v559, %v558
    %v606 = vpack.c.bf16 %v561, %v560
    %v607 = vpack.c.bf16 %v563, %v562
    %v608 = vpack.c.bf16 %v565, %v564
    %v609 = vpack.c.bf16 %v567, %v566
    %v610 = vpack.c.bf16 %v569, %v568
    %v611 = vpack.c.bf16 %v571, %v570
    %v612 = vpack.c.bf16 %v573, %v572
    %v613 = vpack.c.bf16 %v575, %v574
    %v614 = vpack.c.bf16 %v577, %v576
    %v615 = vpack.c.bf16 %v579, %v578
    %v616 = vpack.c.bf16 %v581, %v580
    %v617 = vpack.c.bf16 %v583, %v582
    %v618 = vpack.c.bf16 %v585, %v584
    %v619 = vpack.c.bf16 %v587, %v586
    %v620 = vld [vmem:[%s4 + $0x40] sm:$0xf]
    %v621 = vld [vmem:[%s4 + $0x44] sm:$0xf]
    %v622 = vld [vmem:[%s4 + $0x48] sm:$0xf]
    %v623 = vld [vmem:[%s4 + $0x4c] sm:$0xf]
    %v624 = vld [vmem:[%s4 + $0x50] sm:$0xf]
    %v625 = vld [vmem:[%s4 + $0x54] sm:$0xf]
    %v626 = vld [vmem:[%s4 + $0x58] sm:$0xf]
    %v627 = vld [vmem:[%s4 + $0x5c] sm:$0xf]
    %v628 = vld [vmem:[%s4 + $0x60] sm:$0xf]
    %v629 = vld [vmem:[%s4 + $0x64] sm:$0xf]
    %v630 = vld [vmem:[%s4 + $0x68] sm:$0xf]
    %v631 = vld [vmem:[%s4 + $0x6c] sm:$0xf]
    %v632 = vld [vmem:[%s4 + $0x70] sm:$0xf]
    %v633 = vld [vmem:[%s4 + $0x74] sm:$0xf]
    %v634 = vld [vmem:[%s4 + $0x78] sm:$0xf]
    %v635 = vld [vmem:[%s4 + $0x7c] sm:$0xf]
    %v652 = vunpack.c.l.b16 %v620
    %v653 = vunpack.c.l.b16 %v621
    %v654 = vunpack.c.l.b16 %v622
    %v655 = vunpack.c.l.b16 %v623
    %v656 = vunpack.c.l.b16 %v624
    %v657 = vunpack.c.l.b16 %v625
    %v658 = vunpack.c.l.b16 %v626
    %v659 = vunpack.c.l.b16 %v627
    %v660 = vunpack.c.l.b16 %v628
    %v661 = vunpack.c.l.b16 %v629
    %v662 = vunpack.c.l.b16 %v630
    %v663 = vunpack.c.l.b16 %v631
    %v664 = vunpack.c.l.b16 %v632
    %v665 = vunpack.c.l.b16 %v633
    %v666 = vunpack.c.l.b16 %v634
    %v667 = vunpack.c.l.b16 %v635
    %v668 = vpack.c.b16 %v653, %v652
    %v669 = vpack.c.b16 %v655, %v654
    %v670 = vpack.c.b16 %v657, %v656
    %v671 = vpack.c.b16 %v659, %v658
    %v672 = vpack.c.b16 %v661, %v660
    %v673 = vpack.c.b16 %v663, %v662
    %v674 = vpack.c.b16 %v665, %v664
    %v675 = vpack.c.b16 %v667, %v666
    %684 = vmatprep.subr.bf16.mxu0 0
    %685 = vmatpush1.bf16.msra.mxu0 %v668
    %686 = vmatprep.subr.bf16.mxu0 0
    %687 = vmatpush1.bf16.msra.mxu0 %v669
    %688 = vmatprep.subr.bf16.mxu0 0
    %689 = vmatpush1.bf16.msra.mxu0 %v670
    %690 = vmatprep.subr.bf16.mxu0 0
    %691 = vmatpush1.bf16.msra.mxu0 %v671
    %692 = vmatprep.subr.bf16.mxu0 0
    %693 = vmatpush1.bf16.msra.mxu0 %v672
    %694 = vmatprep.subr.bf16.mxu0 0
    %695 = vmatpush1.bf16.msra.mxu0 %v673
    %696 = vmatprep.subr.bf16.mxu0 0
    %697 = vmatpush1.bf16.msra.mxu0 %v674
    %698 = vmatprep.subr.bf16.mxu0 0
    %699 = vmatpush1.bf16.msra.mxu0 %v675
    %700 = vmatprep.subr.bf16.mxu0 0
    %701 = vmatpush1.bf16.msra.mxu0 0
    %702 = vmatprep.subr.bf16.mxu0 0
    %703 = vmatpush1.bf16.msra.mxu0 0
    %704 = vmatprep.subr.bf16.mxu0 0
    %705 = vmatpush1.bf16.msra.mxu0 0
    %706 = vmatprep.subr.bf16.mxu0 0
    %707 = vmatpush1.bf16.msra.mxu0 0
    %708 = vmatprep.subr.bf16.mxu0 0
    %709 = vmatpush1.bf16.msra.mxu0 0
    %710 = vmatprep.subr.bf16.mxu0 0
    %711 = vmatpush1.bf16.msra.mxu0 0
    %712 = vmatprep.subr.bf16.mxu0 0
    %713 = vmatpush1.bf16.msra.mxu0 0
    %714 = vmatprep.subr.bf16.mxu0 0
    %715 = vmatpush1.bf16.msra.mxu0 0
    %716 = vmatprep.mubr.bf16.mxu0 0
    %717 = vmatmul.mubr.bf16.gmra.mrb[0].mxu0 %v604
    %v718 = vpop.f32.mrb[0].mxu0
    %v719 = vadd.f32 0.0, %v718
    %v720 = vpop.f32.mrb[0].mxu0
    %v721 = vpop.f32.mrb[0].mxu0
    %v722 = vadd.f32 0.0, %v721
    %v723 = vpop.f32.mrb[0].mxu0
    %724 = vmatprep.mubr.bf16.mxu0 0
    %725 = vmatmul.mubr.bf16.gmra.mrb[0].mxu0 %v605
    %v726 = vpop.f32.mrb[0].mxu0
    %v727 = vadd.f32 0.0, %v726
    %v728 = vpop.f32.mrb[0].mxu0
    %v729 = vpop.f32.mrb[0].mxu0
    %v730 = vadd.f32 0.0, %v729
    %v731 = vpop.f32.mrb[0].mxu0
    %732 = vmatprep.mubr.bf16.mxu0 0
    %733 = vmatmul.mubr.bf16.gmra.mrb[0].mxu0 %v606
    %v734 = vpop.f32.mrb[0].mxu0
    %v735 = vadd.f32 0.0, %v734
    %v736 = vpop.f32.mrb[0].mxu0
    %v737 = vpop.f32.mrb[0].mxu0
    %v738 = vadd.f32 0.0, %v737
    %v739 = vpop.f32.mrb[0].mxu0
    %740 = vmatprep.mubr.bf16.mxu0 0
    %741 = vmatmul.mubr.bf16.gmra.mrb[0].mxu0 %v607
    %v742 = vpop.f32.mrb[0].mxu0
    %v743 = vadd.f32 0.0, %v742
    %v744 = vpop.f32.mrb[0].mxu0
    %v745 = vpop.f32.mrb[0].mxu0
    %v746 = vadd.f32 0.0, %v745
    %v747 = vpop.f32.mrb[0].mxu0
    %748 = vmatprep.mubr.bf16.mxu0 0
    %749 = vmatmul.mubr.bf16.gmra.mrb[0].mxu0 %v608
    %v750 = vpop.f32.mrb[0].mxu0
    %v751 = vadd.f32 0.0, %v750
    %v752 = vpop.f32.mrb[0].mxu0
    %v753 = vpop.f32.mrb[0].mxu0
    %v754 = vadd.f32 0.0, %v753
    %v755 = vpop.f32.mrb[0].mxu0
    %756 = vmatprep.mubr.bf16.mxu0 0
    %757 = vmatmul.mubr.bf16.gmra.mrb[0].mxu0 %v609
    %v758 = vpop.f32.mrb[0].mxu0
    %v759 = vadd.f32 0.0, %v758
    %v760 = vpop.f32.mrb[0].mxu0
    %v761 = vpop.f32.mrb[0].mxu0
    %v762 = vadd.f32 0.0, %v761
    %v763 = vpop.f32.mrb[0].mxu0
    %764 = vmatprep.mubr.bf16.mxu0 0
    %765 = vmatmul.mubr.bf16.gmra.mrb[0].mxu0 %v610
    %v766 = vpop.f32.mrb[0].mxu0
    %v767 = vadd.f32 0.0, %v766
    %v768 = vpop.f32.mrb[0].mxu0
    %v769 = vpop.f32.mrb[0].mxu0
    %v770 = vadd.f32 0.0, %v769
    %v771 = vpop.f32.mrb[0].mxu0
    %772 = vmatprep.mubr.bf16.mxu0 0
    %773 = vmatmul.mubr.bf16.gmra.mrb[0].mxu0 %v611
    %v774 = vpop.f32.mrb[0].mxu0
    %v775 = vadd.f32 0.0, %v774
    %v776 = vpop.f32.mrb[0].mxu0
    %v777 = vpop.f32.mrb[0].mxu0
    %v778 = vadd.f32 0.0, %v777
    %v779 = vpop.f32.mrb[0].mxu0
    %780 = vmatprep.mubr.bf16.mxu0 0
    %781 = vmatmul.mubr.bf16.gmra.mrb[0].mxu0 %v612
    %v782 = vpop.f32.mrb[0].mxu0
    %v783 = vadd.f32 0.0, %v782
    %v784 = vpop.f32.mrb[0].mxu0
    %v785 = vpop.f32.mrb[0].mxu0
    %v786 = vadd.f32 0.0, %v785
    %v787 = vpop.f32.mrb[0].mxu0
    %788 = vmatprep.mubr.bf16.mxu0 0
    %789 = vmatmul.mubr.bf16.gmra.mrb[0].mxu0 %v613
    %v790 = vpop.f32.mrb[0].mxu0
    %v791 = vadd.f32 0.0, %v790
    %v792 = vpop.f32.mrb[0].mxu0
    %v793 = vpop.f32.mrb[0].mxu0
    %v794 = vadd.f32 0.0, %v793
    %v795 = vpop.f32.mrb[0].mxu0
    %796 = vmatprep.mubr.bf16.mxu0 0
    %797 = vmatmul.mubr.bf16.gmra.mrb[0].mxu0 %v614
    %v798 = vpop.f32.mrb[0].mxu0
    %v799 = vadd.f32 0.0, %v798
    %v800 = vpop.f32.mrb[0].mxu0
    %v801 = vpop.f32.mrb[0].mxu0
    %v802 = vadd.f32 0.0, %v801
    %v803 = vpop.f32.mrb[0].mxu0
    %804 = vmatprep.mubr.bf16.mxu0 0
    %805 = vmatmul.mubr.bf16.gmra.mrb[0].mxu0 %v615
    %v806 = vpop.f32.mrb[0].mxu0
    %v807 = vadd.f32 0.0, %v806
    %v808 = vpop.f32.mrb[0].mxu0
    %v809 = vpop.f32.mrb[0].mxu0
    %v810 = vadd.f32 0.0, %v809
    %v811 = vpop.f32.mrb[0].mxu0
    %812 = vmatprep.mubr.bf16.mxu0 0
    %813 = vmatmul.mubr.bf16.gmra.mrb[0].mxu0 %v616
    %v814 = vpop.f32.mrb[0].mxu0
    %v815 = vadd.f32 0.0, %v814
    %v816 = vpop.f32.mrb[0].mxu0
    %v817 = vpop.f32.mrb[0].mxu0
    %v818 = vadd.f32 0.0, %v817
    %v819 = vpop.f32.mrb[0].mxu0
    %820 = vmatprep.mubr.bf16.mxu0 0
    %821 = vmatmul.mubr.bf16.gmra.mrb[0].mxu0 %v617
    %v822 = vpop.f32.mrb[0].mxu0
    %v823 = vadd.f32 0.0, %v822
    %v824 = vpop.f32.mrb[0].mxu0
    %v825 = vpop.f32.mrb[0].mxu0
    %v826 = vadd.f32 0.0, %v825
    %v827 = vpop.f32.mrb[0].mxu0
    %828 = vmatprep.mubr.bf16.mxu0 0
    %829 = vmatmul.mubr.bf16.gmra.mrb[0].mxu0 %v618
    %v830 = vpop.f32.mrb[0].mxu0
    %v831 = vadd.f32 0.0, %v830
    %v832 = vpop.f32.mrb[0].mxu0
    %v833 = vpop.f32.mrb[0].mxu0
    %v834 = vadd.f32 0.0, %v833
    %v835 = vpop.f32.mrb[0].mxu0
    %836 = vmatprep.mubr.bf16.mxu0 0
    %837 = vmatmul.mubr.bf16.gmra.mrb[0].mxu0 %v619
    %v838 = vpop.f32.mrb[0].mxu0
    %v839 = vadd.f32 0.0, %v838
    %v840 = vpop.f32.mrb[0].mxu0
    %v841 = vpop.f32.mrb[0].mxu0
    %v842 = vadd.f32 0.0, %v841
    %v843 = vpop.f32.mrb[0].mxu0
    %844 = vdwg.mxu0
    %v861 = vunpack.c.l.b16 %v588
    %v862 = vunpack.c.l.b16 %v589
    %v863 = vunpack.c.l.b16 %v590
    %v864 = vunpack.c.l.b16 %v591
    %v865 = vunpack.c.l.b16 %v592
    %v866 = vunpack.c.l.b16 %v593
    %v867 = vunpack.c.l.b16 %v594
    %v868 = vunpack.c.l.b16 %v595
    %v869 = vunpack.c.l.b16 %v596
    %v870 = vunpack.c.l.b16 %v597
    %v871 = vunpack.c.l.b16 %v598
    %v872 = vunpack.c.l.b16 %v599
    %v873 = vunpack.c.l.b16 %v600
    %v874 = vunpack.c.l.b16 %v601
    %v875 = vunpack.c.l.b16 %v602
    %v876 = vunpack.c.l.b16 %v603
    %v877 = vpack.c.b16 %v862, %v861
    %v878 = vpack.c.b16 %v864, %v863
    %v879 = vpack.c.b16 %v866, %v865
    %v880 = vpack.c.b16 %v868, %v867
    %v881 = vpack.c.b16 %v870, %v869
    %v882 = vpack.c.b16 %v872, %v871
    %v883 = vpack.c.b16 %v874, %v873
    %v884 = vpack.c.b16 %v876, %v875
    %893 = vmatprep.subr.bf16.mxu0 0
    %894 = vmatpush1.bf16.msra.mxu0 %v877
    %895 = vmatprep.subr.bf16.mxu0 0
    %896 = vmatpush1.bf16.msra.mxu0 %v878
    %897 = vmatprep.subr.bf16.mxu0 0
    %898 = vmatpush1.bf16.msra.mxu0 %v879
    %899 = vmatprep.subr.bf16.mxu0 0
    %900 = vmatpush1.bf16.msra.mxu0 %v880
    %901 = vmatprep.subr.bf16.mxu0 0
    %902 = vmatpush1.bf16.msra.mxu0 %v881
    %903 = vmatprep.subr.bf16.mxu0 0
    %904 = vmatpush1.bf16.msra.mxu0 %v882
    %905 = vmatprep.subr.bf16.mxu0 0
    %906 = vmatpush1.bf16.msra.mxu0 %v883
    %907 = vmatprep.subr.bf16.mxu0 0
    %908 = vmatpush1.bf16.msra.mxu0 %v884
    %909 = vmatprep.subr.bf16.mxu0 0
    %910 = vmatpush1.bf16.msra.mxu0 0
    %911 = vmatprep.subr.bf16.mxu0 0
    %912 = vmatpush1.bf16.msra.mxu0 0
    %913 = vmatprep.subr.bf16.mxu0 0
    %914 = vmatpush1.bf16.msra.mxu0 0
    %915 = vmatprep.subr.bf16.mxu0 0
    %916 = vmatpush1.bf16.msra.mxu0 0
    %917 = vmatprep.subr.bf16.mxu0 0
    %918 = vmatpush1.bf16.msra.mxu0 0
    %919 = vmatprep.subr.bf16.mxu0 0
    %920 = vmatpush1.bf16.msra.mxu0 0
    %921 = vmatprep.subr.bf16.mxu0 0
    %922 = vmatpush1.bf16.msra.mxu0 0
    %923 = vmatprep.subr.bf16.mxu0 0
    %924 = vmatpush1.bf16.msra.mxu0 0
    %925 = vmatprep.mubr.bf16.mxu0 0
    %926 = vmatmul.mubr.bf16.gmra.mrb[0].mxu0 %v203
    %v927 = vpop.f32.mrb[0].mxu0
    %v928 = vadd.f32 %v719, %v927
    %v929 = vpop.f32.mrb[0].mxu0
    %v930 = vpop.f32.mrb[0].mxu0
    %v931 = vadd.f32 %v722, %v930
    %v932 = vpop.f32.mrb[0].mxu0
    %933 = vmatprep.mubr.bf16.mxu0 0
    %934 = vmatmul.mubr.bf16.gmra.mrb[0].mxu0 %v204
    %v935 = vpop.f32.mrb[0].mxu0
    %v936 = vadd.f32 %v727, %v935
    %v937 = vpop.f32.mrb[0].mxu0
    %v938 = vpop.f32.mrb[0].mxu0
    %v939 = vadd.f32 %v730, %v938
    %v940 = vpop.f32.mrb[0].mxu0
    %941 = vmatprep.mubr.bf16.mxu0 0
    %942 = vmatmul.mubr.bf16.gmra.mrb[0].mxu0 %v205
    %v943 = vpop.f32.mrb[0].mxu0
    %v944 = vadd.f32 %v735, %v943
    %v945 = vpop.f32.mrb[0].mxu0
    %v946 = vpop.f32.mrb[0].mxu0
    %v947 = vadd.f32 %v738, %v946
    %v948 = vpop.f32.mrb[0].mxu0
    %949 = vmatprep.mubr.bf16.mxu0 0
    %950 = vmatmul.mubr.bf16.gmra.mrb[0].mxu0 %v206
    %v951 = vpop.f32.mrb[0].mxu0
    %v952 = vadd.f32 %v743, %v951
    %v953 = vpop.f32.mrb[0].mxu0
    %v954 = vpop.f32.mrb[0].mxu0
    %v955 = vadd.f32 %v746, %v954
    %v956 = vpop.f32.mrb[0].mxu0
    %957 = vmatprep.mubr.bf16.mxu0 0
    %958 = vmatmul.mubr.bf16.gmra.mrb[0].mxu0 %v207
    %v959 = vpop.f32.mrb[0].mxu0
    %v960 = vadd.f32 %v751, %v959
    %v961 = vpop.f32.mrb[0].mxu0
    %v962 = vpop.f32.mrb[0].mxu0
    %v963 = vadd.f32 %v754, %v962
    %v964 = vpop.f32.mrb[0].mxu0
    %965 = vmatprep.mubr.bf16.mxu0 0
    %966 = vmatmul.mubr.bf16.gmra.mrb[0].mxu0 %v208
    %v967 = vpop.f32.mrb[0].mxu0
    %v968 = vadd.f32 %v759, %v967
    %v969 = vpop.f32.mrb[0].mxu0
    %v970 = vpop.f32.mrb[0].mxu0
    %v971 = vadd.f32 %v762, %v970
    %v972 = vpop.f32.mrb[0].mxu0
    %973 = vmatprep.mubr.bf16.mxu0 0
    %974 = vmatmul.mubr.bf16.gmra.mrb[0].mxu0 %v209
    %v975 = vpop.f32.mrb[0].mxu0
    %v976 = vadd.f32 %v767, %v975
    %v977 = vpop.f32.mrb[0].mxu0
    %v978 = vpop.f32.mrb[0].mxu0
    %v979 = vadd.f32 %v770, %v978
    %v980 = vpop.f32.mrb[0].mxu0
    %981 = vmatprep.mubr.bf16.mxu0 0
    %982 = vmatmul.mubr.bf16.gmra.mrb[0].mxu0 %v210
    %v983 = vpop.f32.mrb[0].mxu0
    %v984 = vadd.f32 %v775, %v983
    %v985 = vpop.f32.mrb[0].mxu0
    %v986 = vpop.f32.mrb[0].mxu0
    %v987 = vadd.f32 %v778, %v986
    %v988 = vpop.f32.mrb[0].mxu0
    %989 = vmatprep.mubr.bf16.mxu0 0
    %990 = vmatmul.mubr.bf16.gmra.mrb[0].mxu0 %v211
    %v991 = vpop.f32.mrb[0].mxu0
    %v992 = vadd.f32 %v783, %v991
    %v993 = vpop.f32.mrb[0].mxu0
    %v994 = vpop.f32.mrb[0].mxu0
    %v995 = vadd.f32 %v786, %v994
    %v996 = vpop.f32.mrb[0].mxu0
    %997 = vmatprep.mubr.bf16.mxu0 0
    %998 = vmatmul.mubr.bf16.gmra.mrb[0].mxu0 %v212
    %v999 = vpop.f32.mrb[0].mxu0
    %v1000 = vadd.f32 %v791, %v999
    %v1001 = vpop.f32.mrb[0].mxu0
    %v1002 = vpop.f32.mrb[0].mxu0
    %v1003 = vadd.f32 %v794, %v1002
    %v1004 = vpop.f32.mrb[0].mxu0
    %1005 = vmatprep.mubr.bf16.mxu0 0
    %1006 = vmatmul.mubr.bf16.gmra.mrb[0].mxu0 %v213
    %v1007 = vpop.f32.mrb[0].mxu0
    %v1008 = vadd.f32 %v799, %v1007
    %v1009 = vpop.f32.mrb[0].mxu0
    %v1010 = vpop.f32.mrb[0].mxu0
    %v1011 = vadd.f32 %v802, %v1010
    %v1012 = vpop.f32.mrb[0].mxu0
    %1013 = vmatprep.mubr.bf16.mxu0 0
    %1014 = vmatmul.mubr.bf16.gmra.mrb[0].mxu0 %v214
    %v1015 = vpop.f32.mrb[0].mxu0
    %v1016 = vadd.f32 %v807, %v1015
    %v1017 = vpop.f32.mrb[0].mxu0
    %v1018 = vpop.f32.mrb[0].mxu0
    %v1019 = vadd.f32 %v810, %v1018
    %v1020 = vpop.f32.mrb[0].mxu0
    %1021 = vmatprep.mubr.bf16.mxu0 0
    %1022 = vmatmul.mubr.bf16.gmra.mrb[0].mxu0 %v215
    %v1023 = vpop.f32.mrb[0].mxu0
    %v1024 = vadd.f32 %v815, %v1023
    %v1025 = vpop.f32.mrb[0].mxu0
    %v1026 = vpop.f32.mrb[0].mxu0
    %v1027 = vadd.f32 %v818, %v1026
    %v1028 = vpop.f32.mrb[0].mxu0
    %1029 = vmatprep.mubr.bf16.mxu0 0
    %1030 = vmatmul.mubr.bf16.gmra.mrb[0].mxu0 %v216
    %v1031 = vpop.f32.mrb[0].mxu0
    %v1032 = vadd.f32 %v823, %v1031
    %v1033 = vpop.f32.mrb[0].mxu0
    %v1034 = vpop.f32.mrb[0].mxu0
    %v1035 = vadd.f32 %v826, %v1034
    %v1036 = vpop.f32.mrb[0].mxu0
    %1037 = vmatprep.mubr.bf16.mxu0 0
    %1038 = vmatmul.mubr.bf16.gmra.mrb[0].mxu0 %v217
    %v1039 = vpop.f32.mrb[0].mxu0
    %v1040 = vadd.f32 %v831, %v1039
    %v1041 = vpop.f32.mrb[0].mxu0
    %v1042 = vpop.f32.mrb[0].mxu0
    %v1043 = vadd.f32 %v834, %v1042
    %v1044 = vpop.f32.mrb[0].mxu0
    %1045 = vmatprep.mubr.bf16.mxu0 0
    %1046 = vmatmul.mubr.bf16.gmra.mrb[0].mxu0 %v218
    %v1047 = vpop.f32.mrb[0].mxu0
    %v1048 = vadd.f32 %v839, %v1047
    %v1049 = vpop.f32.mrb[0].mxu0
    %v1050 = vpop.f32.mrb[0].mxu0
    %v1051 = vadd.f32 %v842, %v1050
    %v1052 = vpop.f32.mrb[0].mxu0
    %1053 = vdwg.mxu0
    %v1054 = vmax.f32 %v928, 0.0
    %v1055 = vmax.f32 %v931, 0.0
    %v1056 = vmax.f32 %v936, 0.0
    %v1057 = vmax.f32 %v939, 0.0
    %v1058 = vmax.f32 %v944, 0.0
    %v1059 = vmax.f32 %v947, 0.0
    %v1060 = vmax.f32 %v952, 0.0
    %v1061 = vmax.f32 %v955, 0.0
    %v1062 = vmax.f32 %v960, 0.0
    %v1063 = vmax.f32 %v963, 0.0
    %v1064 = vmax.f32 %v968, 0.0
    %v1065 = vmax.f32 %v971, 0.0
    %v1066 = vmax.f32 %v976, 0.0
    %v1067 = vmax.f32 %v979, 0.0
    %v1068 = vmax.f32 %v984, 0.0
    %v1069 = vmax.f32 %v987, 0.0
    %v1070 = vmax.f32 %v992, 0.0
    %v1071 = vmax.f32 %v995, 0.0
    %v1072 = vmax.f32 %v1000, 0.0
    %v1073 = vmax.f32 %v1003, 0.0
    %v1074 = vmax.f32 %v1008, 0.0
    %v1075 = vmax.f32 %v1011, 0.0
    %v1076 = vmax.f32 %v1016, 0.0
    %v1077 = vmax.f32 %v1019, 0.0
    %v1078 = vmax.f32 %v1024, 0.0
    %v1079 = vmax.f32 %v1027, 0.0
    %v1080 = vmax.f32 %v1032, 0.0
    %v1081 = vmax.f32 %v1035, 0.0
    %v1082 = vmax.f32 %v1040, 0.0
    %v1083 = vmax.f32 %v1043, 0.0
    %v1084 = vmax.f32 %v1048, 0.0
    %v1085 = vmax.f32 %v1051, 0.0
    %v1086 = vpack.c.bf16 %v1055, %v1054
    %v1087 = vpack.c.bf16 %v1057, %v1056
    %v1088 = vpack.c.bf16 %v1059, %v1058
    %v1089 = vpack.c.bf16 %v1061, %v1060
    %v1090 = vpack.c.bf16 %v1063, %v1062
    %v1091 = vpack.c.bf16 %v1065, %v1064
    %v1092 = vpack.c.bf16 %v1067, %v1066
    %v1093 = vpack.c.bf16 %v1069, %v1068
    %v1094 = vpack.c.bf16 %v1071, %v1070
    %v1095 = vpack.c.bf16 %v1073, %v1072
    %v1096 = vpack.c.bf16 %v1075, %v1074
    %v1097 = vpack.c.bf16 %v1077, %v1076
    %v1098 = vpack.c.bf16 %v1079, %v1078
    %v1099 = vpack.c.bf16 %v1081, %v1080
    %v1100 = vpack.c.bf16 %v1083, %v1082
    %v1101 = vpack.c.bf16 %v1085, %v1084
    %1102 = vmatprep.subr.bf16.mxu0 0
    %1103 = vmatpush1.bf16.msra.mxu0 %v1086
    %1104 = vmatprep.subr.bf16.mxu0 0
    %1105 = vmatpush1.bf16.msra.mxu0 %v1087
    %1106 = vmatprep.subr.bf16.mxu0 0
    %1107 = vmatpush1.bf16.msra.mxu0 %v1088
    %1108 = vmatprep.subr.bf16.mxu0 0
    %1109 = vmatpush1.bf16.msra.mxu0 %v1089
    %1110 = vmatprep.subr.bf16.mxu0 0
    %1111 = vmatpush1.bf16.msra.mxu0 %v1090
    %1112 = vmatprep.subr.bf16.mxu0 0
    %1113 = vmatpush1.bf16.msra.mxu0 %v1091
    %1114 = vmatprep.subr.bf16.mxu0 0
    %1115 = vmatpush1.bf16.msra.mxu0 %v1092
    %1116 = vmatprep.subr.bf16.mxu0 0
    %1117 = vmatpush1.bf16.msra.mxu0 %v1093
    %1118 = vmatprep.subr.bf16.mxu0 0
    %1119 = vmatpush1.bf16.msra.mxu0 %v1094
    %1120 = vmatprep.subr.bf16.mxu0 0
    %1121 = vmatpush1.bf16.msra.mxu0 %v1095
    %1122 = vmatprep.subr.bf16.mxu0 0
    %1123 = vmatpush1.bf16.msra.mxu0 %v1096
    %1124 = vmatprep.subr.bf16.mxu0 0
    %1125 = vmatpush1.bf16.msra.mxu0 %v1097
    %1126 = vmatprep.subr.bf16.mxu0 0
    %1127 = vmatpush1.bf16.msra.mxu0 %v1098
    %1128 = vmatprep.subr.bf16.mxu0 0
    %1129 = vmatpush1.bf16.msra.mxu0 %v1099
    %1130 = vmatprep.subr.bf16.mxu0 0
    %1131 = vmatpush1.bf16.msra.mxu0 %v1100
    %1132 = vmatprep.subr.bf16.mxu0 0
    %1133 = vmatpush1.bf16.msra.mxu0 %v1101
    %1134 = vmatprep.mubr.bf16.mxu0 %v44
    %1135 = vmatmul.mubr.bf16.gmra.mrb[0].mxu0 %v43
    %v1136 = vpop.f32.mrb[0].mxu0
    %v1137 = vadd.f32 0.0, %v1136
    %v1138 = vpop.f32.mrb[0].mxu0
    %v1139 = vpop.f32.mrb[0].mxu0
    %v1140 = vadd.f32 0.0, %v1139
    %v1141 = vpop.f32.mrb[0].mxu0
    %1142 = vmatprep.mubr.bf16.mxu0 %v46
    %1143 = vmatmul.mubr.bf16.gmra.mrb[0].mxu0 %v45
    %v1144 = vpop.f32.mrb[0].mxu0
    %v1145 = vadd.f32 0.0, %v1144
    %v1146 = vpop.f32.mrb[0].mxu0
    %v1147 = vpop.f32.mrb[0].mxu0
    %v1148 = vadd.f32 0.0, %v1147
    %v1149 = vpop.f32.mrb[0].mxu0
    %1150 = vmatprep.mubr.bf16.mxu0 %v48
    %1151 = vmatmul.mubr.bf16.gmra.mrb[0].mxu0 %v47
    %v1152 = vpop.f32.mrb[0].mxu0
    %v1153 = vadd.f32 0.0, %v1152
    %v1154 = vpop.f32.mrb[0].mxu0
    %v1155 = vpop.f32.mrb[0].mxu0
    %v1156 = vadd.f32 0.0, %v1155
    %v1157 = vpop.f32.mrb[0].mxu0
    %1158 = vmatprep.mubr.bf16.mxu0 %v50
    %1159 = vmatmul.mubr.bf16.gmra.mrb[0].mxu0 %v49
    %v1160 = vpop.f32.mrb[0].mxu0
    %v1161 = vadd.f32 0.0, %v1160
    %v1162 = vpop.f32.mrb[0].mxu0
    %v1163 = vpop.f32.mrb[0].mxu0
    %v1164 = vadd.f32 0.0, %v1163
    %v1165 = vpop.f32.mrb[0].mxu0
    %1166 = vmatprep.mubr.bf16.mxu0 %v52
    %1167 = vmatmul.mubr.bf16.gmra.mrb[0].mxu0 %v51
    %v1168 = vpop.f32.mrb[0].mxu0
    %v1169 = vadd.f32 0.0, %v1168
    %v1170 = vpop.f32.mrb[0].mxu0
    %v1171 = vpop.f32.mrb[0].mxu0
    %v1172 = vadd.f32 0.0, %v1171
    %v1173 = vpop.f32.mrb[0].mxu0
    %1174 = vmatprep.mubr.bf16.mxu0 %v54
    %1175 = vmatmul.mubr.bf16.gmra.mrb[0].mxu0 %v53
    %v1176 = vpop.f32.mrb[0].mxu0
    %v1177 = vadd.f32 0.0, %v1176
    %v1178 = vpop.f32.mrb[0].mxu0
    %v1179 = vpop.f32.mrb[0].mxu0
    %v1180 = vadd.f32 0.0, %v1179
    %v1181 = vpop.f32.mrb[0].mxu0
    %1182 = vmatprep.mubr.bf16.mxu0 %v56
    %1183 = vmatmul.mubr.bf16.gmra.mrb[0].mxu0 %v55
    %v1184 = vpop.f32.mrb[0].mxu0
    %v1185 = vadd.f32 0.0, %v1184
    %v1186 = vpop.f32.mrb[0].mxu0
    %v1187 = vpop.f32.mrb[0].mxu0
    %v1188 = vadd.f32 0.0, %v1187
    %v1189 = vpop.f32.mrb[0].mxu0
    %1190 = vmatprep.mubr.bf16.mxu0 %v58
    %1191 = vmatmul.mubr.bf16.gmra.mrb[0].mxu0 %v57
    %v1192 = vpop.f32.mrb[0].mxu0
    %v1193 = vadd.f32 0.0, %v1192
    %v1194 = vpop.f32.mrb[0].mxu0
    %v1195 = vpop.f32.mrb[0].mxu0
    %v1196 = vadd.f32 0.0, %v1195
    %v1197 = vpop.f32.mrb[0].mxu0
    %1198 = vmatprep.mubr.bf16.mxu0 %v60
    %1199 = vmatmul.mubr.bf16.gmra.mrb[0].mxu0 %v59
    %v1200 = vpop.f32.mrb[0].mxu0
    %v1201 = vadd.f32 0.0, %v1200
    %v1202 = vpop.f32.mrb[0].mxu0
    %v1203 = vpop.f32.mrb[0].mxu0
    %v1204 = vadd.f32 0.0, %v1203
    %v1205 = vpop.f32.mrb[0].mxu0
    %1206 = vmatprep.mubr.bf16.mxu0 %v62
    %1207 = vmatmul.mubr.bf16.gmra.mrb[0].mxu0 %v61
    %v1208 = vpop.f32.mrb[0].mxu0
    %v1209 = vadd.f32 0.0, %v1208
    %v1210 = vpop.f32.mrb[0].mxu0
    %v1211 = vpop.f32.mrb[0].mxu0
    %v1212 = vadd.f32 0.0, %v1211
    %v1213 = vpop.f32.mrb[0].mxu0
    %1214 = vmatprep.mubr.bf16.mxu0 %v64
    %1215 = vmatmul.mubr.bf16.gmra.mrb[0].mxu0 %v63
    %v1216 = vpop.f32.mrb[0].mxu0
    %v1217 = vadd.f32 0.0, %v1216
    %v1218 = vpop.f32.mrb[0].mxu0
    %v1219 = vpop.f32.mrb[0].mxu0
    %v1220 = vadd.f32 0.0, %v1219
    %v1221 = vpop.f32.mrb[0].mxu0
    %1222 = vmatprep.mubr.bf16.mxu0 %v66
    %1223 = vmatmul.mubr.bf16.gmra.mrb[0].mxu0 %v65
    %v1224 = vpop.f32.mrb[0].mxu0
    %v1225 = vadd.f32 0.0, %v1224
    %v1226 = vpop.f32.mrb[0].mxu0
    %v1227 = vpop.f32.mrb[0].mxu0
    %v1228 = vadd.f32 0.0, %v1227
    %v1229 = vpop.f32.mrb[0].mxu0
    %1230 = vmatprep.mubr.bf16.mxu0 %v68
    %1231 = vmatmul.mubr.bf16.gmra.mrb[0].mxu0 %v67
    %v1232 = vpop.f32.mrb[0].mxu0
    %v1233 = vadd.f32 0.0, %v1232
    %v1234 = vpop.f32.mrb[0].mxu0
    %v1235 = vpop.f32.mrb[0].mxu0
    %v1236 = vadd.f32 0.0, %v1235
    %v1237 = vpop.f32.mrb[0].mxu0
    %1238 = vmatprep.mubr.bf16.mxu0 %v70
    %1239 = vmatmul.mubr.bf16.gmra.mrb[0].mxu0 %v69
    %v1240 = vpop.f32.mrb[0].mxu0
    %v1241 = vadd.f32 0.0, %v1240
    %v1242 = vpop.f32.mrb[0].mxu0
    %v1243 = vpop.f32.mrb[0].mxu0
    %v1244 = vadd.f32 0.0, %v1243
    %v1245 = vpop.f32.mrb[0].mxu0
    %1246 = vmatprep.mubr.bf16.mxu0 %v72
    %1247 = vmatmul.mubr.bf16.gmra.mrb[0].mxu0 %v71
    %v1248 = vpop.f32.mrb[0].mxu0
    %v1249 = vadd.f32 0.0, %v1248
    %v1250 = vpop.f32.mrb[0].mxu0
    %v1251 = vpop.f32.mrb[0].mxu0
    %v1252 = vadd.f32 0.0, %v1251
    %v1253 = vpop.f32.mrb[0].mxu0
    %1254 = vmatprep.mubr.bf16.mxu0 %v74
    %1255 = vmatmul.mubr.bf16.gmra.mrb[0].mxu0 %v73
    %v1256 = vpop.f32.mrb[0].mxu0
    %v1257 = vadd.f32 0.0, %v1256
    %v1258 = vpop.f32.mrb[0].mxu0
    %v1259 = vpop.f32.mrb[0].mxu0
    %v1260 = vadd.f32 0.0, %v1259
    %v1261 = vpop.f32.mrb[0].mxu0
    %1262 = vdwg.mxu0
    %v1263 = vmul.f32 %v1137, %v399
    %v1264 = vmul.f32 %v1140, %v404
    %v1265 = vmul.f32 %v1145, %v409
    %v1266 = vmul.f32 %v1148, %v414
    %v1267 = vmul.f32 %v1153, %v419
    %v1268 = vmul.f32 %v1156, %v424
    %v1269 = vmul.f32 %v1161, %v429
    %v1270 = vmul.f32 %v1164, %v434
    %v1271 = vmul.f32 %v1169, %v439
    %v1272 = vmul.f32 %v1172, %v444
    %v1273 = vmul.f32 %v1177, %v449
    %v1274 = vmul.f32 %v1180, %v454
    %v1275 = vmul.f32 %v1185, %v459
    %v1276 = vmul.f32 %v1188, %v464
    %v1277 = vmul.f32 %v1193, %v469
    %v1278 = vmul.f32 %v1196, %v474
    %v1279 = vmul.f32 %v1201, %v479
    %v1280 = vmul.f32 %v1204, %v484
    %v1281 = vmul.f32 %v1209, %v489
    %v1282 = vmul.f32 %v1212, %v494
    %v1283 = vmul.f32 %v1217, %v499
    %v1284 = vmul.f32 %v1220, %v504
    %v1285 = vmul.f32 %v1225, %v509
    %v1286 = vmul.f32 %v1228, %v514
    %v1287 = vmul.f32 %v1233, %v519
    %v1288 = vmul.f32 %v1236, %v524
    %v1289 = vmul.f32 %v1241, %v529
    %v1290 = vmul.f32 %v1244, %v534
    %v1291 = vmul.f32 %v1249, %v539
    %v1292 = vmul.f32 %v1252, %v544
    %v1293 = vmul.f32 %v1257, %v549
    %v1294 = vmul.f32 %v1260, %v554
    %v1295 = vld [vmem:[%s5] sm:$0xf]
    %v1296 = vld [vmem:[%s5 + $0x4] sm:$0xf]
    %v1297 = vld [vmem:[%s5 + $0x8] sm:$0xf]
    %v1298 = vld [vmem:[%s5 + $0xc] sm:$0xf]
    %v1299 = vld [vmem:[%s5 + $0x10] sm:$0xf]
    %v1300 = vld [vmem:[%s5 + $0x14] sm:$0xf]
    %v1301 = vld [vmem:[%s5 + $0x18] sm:$0xf]
    %v1302 = vld [vmem:[%s5 + $0x1c] sm:$0xf]
    %v1303 = vld [vmem:[%s5 + $0x20] sm:$0xf]
    %v1304 = vld [vmem:[%s5 + $0x24] sm:$0xf]
    %v1305 = vld [vmem:[%s5 + $0x28] sm:$0xf]
    %v1306 = vld [vmem:[%s5 + $0x2c] sm:$0xf]
    %v1307 = vld [vmem:[%s5 + $0x30] sm:$0xf]
    %v1308 = vld [vmem:[%s5 + $0x34] sm:$0xf]
    %v1309 = vld [vmem:[%s5 + $0x38] sm:$0xf]
    %v1310 = vld [vmem:[%s5 + $0x3c] sm:$0xf]
    %v1311 = vpack.c.bf16 %v1264, %v1263
    %v1312 = vpack.c.bf16 %v1266, %v1265
    %v1313 = vpack.c.bf16 %v1268, %v1267
    %v1314 = vpack.c.bf16 %v1270, %v1269
    %v1315 = vpack.c.bf16 %v1272, %v1271
    %v1316 = vpack.c.bf16 %v1274, %v1273
    %v1317 = vpack.c.bf16 %v1276, %v1275
    %v1318 = vpack.c.bf16 %v1278, %v1277
    %v1319 = vpack.c.bf16 %v1280, %v1279
    %v1320 = vpack.c.bf16 %v1282, %v1281
    %v1321 = vpack.c.bf16 %v1284, %v1283
    %v1322 = vpack.c.bf16 %v1286, %v1285
    %v1323 = vpack.c.bf16 %v1288, %v1287
    %v1324 = vpack.c.bf16 %v1290, %v1289
    %v1325 = vpack.c.bf16 %v1292, %v1291
    %v1326 = vpack.c.bf16 %v1294, %v1293
    %v1327 = vld [vmem:[%s5 + $0x40] sm:$0xf]
    %v1328 = vld [vmem:[%s5 + $0x44] sm:$0xf]
    %v1329 = vld [vmem:[%s5 + $0x48] sm:$0xf]
    %v1330 = vld [vmem:[%s5 + $0x4c] sm:$0xf]
    %v1331 = vld [vmem:[%s5 + $0x50] sm:$0xf]
    %v1332 = vld [vmem:[%s5 + $0x54] sm:$0xf]
    %v1333 = vld [vmem:[%s5 + $0x58] sm:$0xf]
    %v1334 = vld [vmem:[%s5 + $0x5c] sm:$0xf]
    %v1335 = vld [vmem:[%s5 + $0x60] sm:$0xf]
    %v1336 = vld [vmem:[%s5 + $0x64] sm:$0xf]
    %v1337 = vld [vmem:[%s5 + $0x68] sm:$0xf]
    %v1338 = vld [vmem:[%s5 + $0x6c] sm:$0xf]
    %v1339 = vld [vmem:[%s5 + $0x70] sm:$0xf]
    %v1340 = vld [vmem:[%s5 + $0x74] sm:$0xf]
    %v1341 = vld [vmem:[%s5 + $0x78] sm:$0xf]
    %v1342 = vld [vmem:[%s5 + $0x7c] sm:$0xf]
    %v1359 = vunpack.c.l.b16 %v1327
    %v1360 = vunpack.c.l.b16 %v1328
    %v1361 = vunpack.c.l.b16 %v1329
    %v1362 = vunpack.c.l.b16 %v1330
    %v1363 = vunpack.c.l.b16 %v1331
    %v1364 = vunpack.c.l.b16 %v1332
    %v1365 = vunpack.c.l.b16 %v1333
    %v1366 = vunpack.c.l.b16 %v1334
    %v1367 = vunpack.c.l.b16 %v1335
    %v1368 = vunpack.c.l.b16 %v1336
    %v1369 = vunpack.c.l.b16 %v1337
    %v1370 = vunpack.c.l.b16 %v1338
    %v1371 = vunpack.c.l.b16 %v1339
    %v1372 = vunpack.c.l.b16 %v1340
    %v1373 = vunpack.c.l.b16 %v1341
    %v1374 = vunpack.c.l.b16 %v1342
    %v1375 = vpack.c.b16 %v1360, %v1359
    %v1376 = vpack.c.b16 %v1362, %v1361
    %v1377 = vpack.c.b16 %v1364, %v1363
    %v1378 = vpack.c.b16 %v1366, %v1365
    %v1379 = vpack.c.b16 %v1368, %v1367
    %v1380 = vpack.c.b16 %v1370, %v1369
    %v1381 = vpack.c.b16 %v1372, %v1371
    %v1382 = vpack.c.b16 %v1374, %v1373
    %1391 = vmatprep.subr.bf16.mxu0 0
    %1392 = vmatpush1.bf16.msra.mxu0 %v1375
    %1393 = vmatprep.subr.bf16.mxu0 0
    %1394 = vmatpush1.bf16.msra.mxu0 %v1376
    %1395 = vmatprep.subr.bf16.mxu0 0
    %1396 = vmatpush1.bf16.msra.mxu0 %v1377
    %1397 = vmatprep.subr.bf16.mxu0 0
    %1398 = vmatpush1.bf16.msra.mxu0 %v1378
    %1399 = vmatprep.subr.bf16.mxu0 0
    %1400 = vmatpush1.bf16.msra.mxu0 %v1379
    %1401 = vmatprep.subr.bf16.mxu0 0
    %1402 = vmatpush1.bf16.msra.mxu0 %v1380
    %1403 = vmatprep.subr.bf16.mxu0 0
    %1404 = vmatpush1.bf16.msra.mxu0 %v1381
    %1405 = vmatprep.subr.bf16.mxu0 0
    %1406 = vmatpush1.bf16.msra.mxu0 %v1382
    %1407 = vmatprep.subr.bf16.mxu0 0
    %1408 = vmatpush1.bf16.msra.mxu0 0
    %1409 = vmatprep.subr.bf16.mxu0 0
    %1410 = vmatpush1.bf16.msra.mxu0 0
    %1411 = vmatprep.subr.bf16.mxu0 0
    %1412 = vmatpush1.bf16.msra.mxu0 0
    %1413 = vmatprep.subr.bf16.mxu0 0
    %1414 = vmatpush1.bf16.msra.mxu0 0
    %1415 = vmatprep.subr.bf16.mxu0 0
    %1416 = vmatpush1.bf16.msra.mxu0 0
    %1417 = vmatprep.subr.bf16.mxu0 0
    %1418 = vmatpush1.bf16.msra.mxu0 0
    %1419 = vmatprep.subr.bf16.mxu0 0
    %1420 = vmatpush1.bf16.msra.mxu0 0
    %1421 = vmatprep.subr.bf16.mxu0 0
    %1422 = vmatpush1.bf16.msra.mxu0 0
    %1423 = vmatprep.mubr.bf16.mxu0 0
    %1424 = vmatmul.mubr.bf16.gmra.mrb[0].mxu0 %v1311
    %v1425 = vpop.f32.mrb[0].mxu0
    %v1426 = vadd.f32 0.0, %v1425
    %v1427 = vpop.f32.mrb[0].mxu0
    %v1428 = vpop.f32.mrb[0].mxu0
    %v1429 = vadd.f32 0.0, %v1428
    %v1430 = vpop.f32.mrb[0].mxu0
    %1431 = vmatprep.mubr.bf16.mxu0 0
    %1432 = vmatmul.mubr.bf16.gmra.mrb[0].mxu0 %v1312
    %v1433 = vpop.f32.mrb[0].mxu0
    %v1434 = vadd.f32 0.0, %v1433
    %v1435 = vpop.f32.mrb[0].mxu0
    %v1436 = vpop.f32.mrb[0].mxu0
    %v1437 = vadd.f32 0.0, %v1436
    %v1438 = vpop.f32.mrb[0].mxu0
    %1439 = vmatprep.mubr.bf16.mxu0 0
    %1440 = vmatmul.mubr.bf16.gmra.mrb[0].mxu0 %v1313
    %v1441 = vpop.f32.mrb[0].mxu0
    %v1442 = vadd.f32 0.0, %v1441
    %v1443 = vpop.f32.mrb[0].mxu0
    %v1444 = vpop.f32.mrb[0].mxu0
    %v1445 = vadd.f32 0.0, %v1444
    %v1446 = vpop.f32.mrb[0].mxu0
    %1447 = vmatprep.mubr.bf16.mxu0 0
    %1448 = vmatmul.mubr.bf16.gmra.mrb[0].mxu0 %v1314
    %v1449 = vpop.f32.mrb[0].mxu0
    %v1450 = vadd.f32 0.0, %v1449
    %v1451 = vpop.f32.mrb[0].mxu0
    %v1452 = vpop.f32.mrb[0].mxu0
    %v1453 = vadd.f32 0.0, %v1452
    %v1454 = vpop.f32.mrb[0].mxu0
    %1455 = vmatprep.mubr.bf16.mxu0 0
    %1456 = vmatmul.mubr.bf16.gmra.mrb[0].mxu0 %v1315
    %v1457 = vpop.f32.mrb[0].mxu0
    %v1458 = vadd.f32 0.0, %v1457
    %v1459 = vpop.f32.mrb[0].mxu0
    %v1460 = vpop.f32.mrb[0].mxu0
    %v1461 = vadd.f32 0.0, %v1460
    %v1462 = vpop.f32.mrb[0].mxu0
    %1463 = vmatprep.mubr.bf16.mxu0 0
    %1464 = vmatmul.mubr.bf16.gmra.mrb[0].mxu0 %v1316
    %v1465 = vpop.f32.mrb[0].mxu0
    %v1466 = vadd.f32 0.0, %v1465
    %v1467 = vpop.f32.mrb[0].mxu0
    %v1468 = vpop.f32.mrb[0].mxu0
    %v1469 = vadd.f32 0.0, %v1468
    %v1470 = vpop.f32.mrb[0].mxu0
    %1471 = vmatprep.mubr.bf16.mxu0 0
    %1472 = vmatmul.mubr.bf16.gmra.mrb[0].mxu0 %v1317
    %v1473 = vpop.f32.mrb[0].mxu0
    %v1474 = vadd.f32 0.0, %v1473
    %v1475 = vpop.f32.mrb[0].mxu0
    %v1476 = vpop.f32.mrb[0].mxu0
    %v1477 = vadd.f32 0.0, %v1476
    %v1478 = vpop.f32.mrb[0].mxu0
    %1479 = vmatprep.mubr.bf16.mxu0 0
    %1480 = vmatmul.mubr.bf16.gmra.mrb[0].mxu0 %v1318
    %v1481 = vpop.f32.mrb[0].mxu0
    %v1482 = vadd.f32 0.0, %v1481
    %v1483 = vpop.f32.mrb[0].mxu0
    %v1484 = vpop.f32.mrb[0].mxu0
    %v1485 = vadd.f32 0.0, %v1484
    %v1486 = vpop.f32.mrb[0].mxu0
    %1487 = vmatprep.mubr.bf16.mxu0 0
    %1488 = vmatmul.mubr.bf16.gmra.mrb[0].mxu0 %v1319
    %v1489 = vpop.f32.mrb[0].mxu0
    %v1490 = vadd.f32 0.0, %v1489
    %v1491 = vpop.f32.mrb[0].mxu0
    %v1492 = vpop.f32.mrb[0].mxu0
    %v1493 = vadd.f32 0.0, %v1492
    %v1494 = vpop.f32.mrb[0].mxu0
    %1495 = vmatprep.mubr.bf16.mxu0 0
    %1496 = vmatmul.mubr.bf16.gmra.mrb[0].mxu0 %v1320
    %v1497 = vpop.f32.mrb[0].mxu0
    %v1498 = vadd.f32 0.0, %v1497
    %v1499 = vpop.f32.mrb[0].mxu0
    %v1500 = vpop.f32.mrb[0].mxu0
    %v1501 = vadd.f32 0.0, %v1500
    %v1502 = vpop.f32.mrb[0].mxu0
    %1503 = vmatprep.mubr.bf16.mxu0 0
    %1504 = vmatmul.mubr.bf16.gmra.mrb[0].mxu0 %v1321
    %v1505 = vpop.f32.mrb[0].mxu0
    %v1506 = vadd.f32 0.0, %v1505
    %v1507 = vpop.f32.mrb[0].mxu0
    %v1508 = vpop.f32.mrb[0].mxu0
    %v1509 = vadd.f32 0.0, %v1508
    %v1510 = vpop.f32.mrb[0].mxu0
    %1511 = vmatprep.mubr.bf16.mxu0 0
    %1512 = vmatmul.mubr.bf16.gmra.mrb[0].mxu0 %v1322
    %v1513 = vpop.f32.mrb[0].mxu0
    %v1514 = vadd.f32 0.0, %v1513
    %v1515 = vpop.f32.mrb[0].mxu0
    %v1516 = vpop.f32.mrb[0].mxu0
    %v1517 = vadd.f32 0.0, %v1516
    %v1518 = vpop.f32.mrb[0].mxu0
    %1519 = vmatprep.mubr.bf16.mxu0 0
    %1520 = vmatmul.mubr.bf16.gmra.mrb[0].mxu0 %v1323
    %v1521 = vpop.f32.mrb[0].mxu0
    %v1522 = vadd.f32 0.0, %v1521
    %v1523 = vpop.f32.mrb[0].mxu0
    %v1524 = vpop.f32.mrb[0].mxu0
    %v1525 = vadd.f32 0.0, %v1524
    %v1526 = vpop.f32.mrb[0].mxu0
    %1527 = vmatprep.mubr.bf16.mxu0 0
    %1528 = vmatmul.mubr.bf16.gmra.mrb[0].mxu0 %v1324
    %v1529 = vpop.f32.mrb[0].mxu0
    %v1530 = vadd.f32 0.0, %v1529
    %v1531 = vpop.f32.mrb[0].mxu0
    %v1532 = vpop.f32.mrb[0].mxu0
    %v1533 = vadd.f32 0.0, %v1532
    %v1534 = vpop.f32.mrb[0].mxu0
    %1535 = vmatprep.mubr.bf16.mxu0 0
    %1536 = vmatmul.mubr.bf16.gmra.mrb[0].mxu0 %v1325
    %v1537 = vpop.f32.mrb[0].mxu0
    %v1538 = vadd.f32 0.0, %v1537
    %v1539 = vpop.f32.mrb[0].mxu0
    %v1540 = vpop.f32.mrb[0].mxu0
    %v1541 = vadd.f32 0.0, %v1540
    %v1542 = vpop.f32.mrb[0].mxu0
    %1543 = vmatprep.mubr.bf16.mxu0 0
    %1544 = vmatmul.mubr.bf16.gmra.mrb[0].mxu0 %v1326
    %v1545 = vpop.f32.mrb[0].mxu0
    %v1546 = vadd.f32 0.0, %v1545
    %v1547 = vpop.f32.mrb[0].mxu0
    %v1548 = vpop.f32.mrb[0].mxu0
    %v1549 = vadd.f32 0.0, %v1548
    %v1550 = vpop.f32.mrb[0].mxu0
    %1551 = vdwg.mxu0
    %v1568 = vunpack.c.l.b16 %v1295
    %v1569 = vunpack.c.l.b16 %v1296
    %v1570 = vunpack.c.l.b16 %v1297
    %v1571 = vunpack.c.l.b16 %v1298
    %v1572 = vunpack.c.l.b16 %v1299
    %v1573 = vunpack.c.l.b16 %v1300
    %v1574 = vunpack.c.l.b16 %v1301
    %v1575 = vunpack.c.l.b16 %v1302
    %v1576 = vunpack.c.l.b16 %v1303
    %v1577 = vunpack.c.l.b16 %v1304
    %v1578 = vunpack.c.l.b16 %v1305
    %v1579 = vunpack.c.l.b16 %v1306
    %v1580 = vunpack.c.l.b16 %v1307
    %v1581 = vunpack.c.l.b16 %v1308
    %v1582 = vunpack.c.l.b16 %v1309
    %v1583 = vunpack.c.l.b16 %v1310
    %v1584 = vpack.c.b16 %v1569, %v1568
    %v1585 = vpack.c.b16 %v1571, %v1570
    %v1586 = vpack.c.b16 %v1573, %v1572
    %v1587 = vpack.c.b16 %v1575, %v1574
    %v1588 = vpack.c.b16 %v1577, %v1576
    %v1589 = vpack.c.b16 %v1579, %v1578
    %v1590 = vpack.c.b16 %v1581, %v1580
    %v1591 = vpack.c.b16 %v1583, %v1582
    %1600 = vmatprep.subr.bf16.mxu0 0
    %1601 = vmatpush1.bf16.msra.mxu0 %v1584
    %1602 = vmatprep.subr.bf16.mxu0 0
    %1603 = vmatpush1.bf16.msra.mxu0 %v1585
    %1604 = vmatprep.subr.bf16.mxu0 0
    %1605 = vmatpush1.bf16.msra.mxu0 %v1586
    %1606 = vmatprep.subr.bf16.mxu0 0
    %1607 = vmatpush1.bf16.msra.mxu0 %v1587
    %1608 = vmatprep.subr.bf16.mxu0 0
    %1609 = vmatpush1.bf16.msra.mxu0 %v1588
    %1610 = vmatprep.subr.bf16.mxu0 0
    %1611 = vmatpush1.bf16.msra.mxu0 %v1589
    %1612 = vmatprep.subr.bf16.mxu0 0
    %1613 = vmatpush1.bf16.msra.mxu0 %v1590
    %1614 = vmatprep.subr.bf16.mxu0 0
    %1615 = vmatpush1.bf16.msra.mxu0 %v1591
    %1616 = vmatprep.subr.bf16.mxu0 0
    %1617 = vmatpush1.bf16.msra.mxu0 0
    %1618 = vmatprep.subr.bf16.mxu0 0
    %1619 = vmatpush1.bf16.msra.mxu0 0
    %1620 = vmatprep.subr.bf16.mxu0 0
    %1621 = vmatpush1.bf16.msra.mxu0 0
    %1622 = vmatprep.subr.bf16.mxu0 0
    %1623 = vmatpush1.bf16.msra.mxu0 0
    %1624 = vmatprep.subr.bf16.mxu0 0
    %1625 = vmatpush1.bf16.msra.mxu0 0
    %1626 = vmatprep.subr.bf16.mxu0 0
    %1627 = vmatpush1.bf16.msra.mxu0 0
    %1628 = vmatprep.subr.bf16.mxu0 0
    %1629 = vmatpush1.bf16.msra.mxu0 0
    %1630 = vmatprep.subr.bf16.mxu0 0
    %1631 = vmatpush1.bf16.msra.mxu0 0
    %1632 = vmatprep.mubr.bf16.mxu0 0
    %1633 = vmatmul.mubr.bf16.gmra.mrb[0].mxu0 %v1086
    %v1634 = vpop.f32.mrb[0].mxu0
    %v1635 = vadd.f32 %v1426, %v1634
    %v1636 = vpop.f32.mrb[0].mxu0
    %v1637 = vpop.f32.mrb[0].mxu0
    %v1638 = vadd.f32 %v1429, %v1637
    %v1639 = vpop.f32.mrb[0].mxu0
    %1640 = vmatprep.mubr.bf16.mxu0 0
    %1641 = vmatmul.mubr.bf16.gmra.mrb[0].mxu0 %v1087
    %v1642 = vpop.f32.mrb[0].mxu0
    %v1643 = vadd.f32 %v1434, %v1642
    %v1644 = vpop.f32.mrb[0].mxu0
    %v1645 = vpop.f32.mrb[0].mxu0
    %v1646 = vadd.f32 %v1437, %v1645
    %v1647 = vpop.f32.mrb[0].mxu0
    %1648 = vmatprep.mubr.bf16.mxu0 0
    %1649 = vmatmul.mubr.bf16.gmra.mrb[0].mxu0 %v1088
    %v1650 = vpop.f32.mrb[0].mxu0
    %v1651 = vadd.f32 %v1442, %v1650
    %v1652 = vpop.f32.mrb[0].mxu0
    %v1653 = vpop.f32.mrb[0].mxu0
    %v1654 = vadd.f32 %v1445, %v1653
    %v1655 = vpop.f32.mrb[0].mxu0
    %1656 = vmatprep.mubr.bf16.mxu0 0
    %1657 = vmatmul.mubr.bf16.gmra.mrb[0].mxu0 %v1089
    %v1658 = vpop.f32.mrb[0].mxu0
    %v1659 = vadd.f32 %v1450, %v1658
    %v1660 = vpop.f32.mrb[0].mxu0
    %v1661 = vpop.f32.mrb[0].mxu0
    %v1662 = vadd.f32 %v1453, %v1661
    %v1663 = vpop.f32.mrb[0].mxu0
    %1664 = vmatprep.mubr.bf16.mxu0 0
    %1665 = vmatmul.mubr.bf16.gmra.mrb[0].mxu0 %v1090
    %v1666 = vpop.f32.mrb[0].mxu0
    %v1667 = vadd.f32 %v1458, %v1666
    %v1668 = vpop.f32.mrb[0].mxu0
    %v1669 = vpop.f32.mrb[0].mxu0
    %v1670 = vadd.f32 %v1461, %v1669
    %v1671 = vpop.f32.mrb[0].mxu0
    %1672 = vmatprep.mubr.bf16.mxu0 0
    %1673 = vmatmul.mubr.bf16.gmra.mrb[0].mxu0 %v1091
    %v1674 = vpop.f32.mrb[0].mxu0
    %v1675 = vadd.f32 %v1466, %v1674
    %v1676 = vpop.f32.mrb[0].mxu0
    %v1677 = vpop.f32.mrb[0].mxu0
    %v1678 = vadd.f32 %v1469, %v1677
    %v1679 = vpop.f32.mrb[0].mxu0
    %1680 = vmatprep.mubr.bf16.mxu0 0
    %1681 = vmatmul.mubr.bf16.gmra.mrb[0].mxu0 %v1092
    %v1682 = vpop.f32.mrb[0].mxu0
    %v1683 = vadd.f32 %v1474, %v1682
    %v1684 = vpop.f32.mrb[0].mxu0
    %v1685 = vpop.f32.mrb[0].mxu0
    %v1686 = vadd.f32 %v1477, %v1685
    %v1687 = vpop.f32.mrb[0].mxu0
    %1688 = vmatprep.mubr.bf16.mxu0 0
    %1689 = vmatmul.mubr.bf16.gmra.mrb[0].mxu0 %v1093
    %v1690 = vpop.f32.mrb[0].mxu0
    %v1691 = vadd.f32 %v1482, %v1690
    %v1692 = vpop.f32.mrb[0].mxu0
    %v1693 = vpop.f32.mrb[0].mxu0
    %v1694 = vadd.f32 %v1485, %v1693
    %v1695 = vpop.f32.mrb[0].mxu0
    %1696 = vmatprep.mubr.bf16.mxu0 0
    %1697 = vmatmul.mubr.bf16.gmra.mrb[0].mxu0 %v1094
    %v1698 = vpop.f32.mrb[0].mxu0
    %v1699 = vadd.f32 %v1490, %v1698
    %v1700 = vpop.f32.mrb[0].mxu0
    %v1701 = vpop.f32.mrb[0].mxu0
    %v1702 = vadd.f32 %v1493, %v1701
    %v1703 = vpop.f32.mrb[0].mxu0
    %1704 = vmatprep.mubr.bf16.mxu0 0
    %1705 = vmatmul.mubr.bf16.gmra.mrb[0].mxu0 %v1095
    %v1706 = vpop.f32.mrb[0].mxu0
    %v1707 = vadd.f32 %v1498, %v1706
    %v1708 = vpop.f32.mrb[0].mxu0
    %v1709 = vpop.f32.mrb[0].mxu0
    %v1710 = vadd.f32 %v1501, %v1709
    %v1711 = vpop.f32.mrb[0].mxu0
    %1712 = vmatprep.mubr.bf16.mxu0 0
    %1713 = vmatmul.mubr.bf16.gmra.mrb[0].mxu0 %v1096
    %v1714 = vpop.f32.mrb[0].mxu0
    %v1715 = vadd.f32 %v1506, %v1714
    %v1716 = vpop.f32.mrb[0].mxu0
    %v1717 = vpop.f32.mrb[0].mxu0
    %v1718 = vadd.f32 %v1509, %v1717
    %v1719 = vpop.f32.mrb[0].mxu0
    %1720 = vmatprep.mubr.bf16.mxu0 0
    %1721 = vmatmul.mubr.bf16.gmra.mrb[0].mxu0 %v1097
    %v1722 = vpop.f32.mrb[0].mxu0
    %v1723 = vadd.f32 %v1514, %v1722
    %v1724 = vpop.f32.mrb[0].mxu0
    %v1725 = vpop.f32.mrb[0].mxu0
    %v1726 = vadd.f32 %v1517, %v1725
    %v1727 = vpop.f32.mrb[0].mxu0
    %1728 = vmatprep.mubr.bf16.mxu0 0
    %1729 = vmatmul.mubr.bf16.gmra.mrb[0].mxu0 %v1098
    %v1730 = vpop.f32.mrb[0].mxu0
    %v1731 = vadd.f32 %v1522, %v1730
    %v1732 = vpop.f32.mrb[0].mxu0
    %v1733 = vpop.f32.mrb[0].mxu0
    %v1734 = vadd.f32 %v1525, %v1733
    %v1735 = vpop.f32.mrb[0].mxu0
    %1736 = vmatprep.mubr.bf16.mxu0 0
    %1737 = vmatmul.mubr.bf16.gmra.mrb[0].mxu0 %v1099
    %v1738 = vpop.f32.mrb[0].mxu0
    %v1739 = vadd.f32 %v1530, %v1738
    %v1740 = vpop.f32.mrb[0].mxu0
    %v1741 = vpop.f32.mrb[0].mxu0
    %v1742 = vadd.f32 %v1533, %v1741
    %v1743 = vpop.f32.mrb[0].mxu0
    %1744 = vmatprep.mubr.bf16.mxu0 0
    %1745 = vmatmul.mubr.bf16.gmra.mrb[0].mxu0 %v1100
    %v1746 = vpop.f32.mrb[0].mxu0
    %v1747 = vadd.f32 %v1538, %v1746
    %v1748 = vpop.f32.mrb[0].mxu0
    %v1749 = vpop.f32.mrb[0].mxu0
    %v1750 = vadd.f32 %v1541, %v1749
    %v1751 = vpop.f32.mrb[0].mxu0
    %1752 = vmatprep.mubr.bf16.mxu0 0
    %1753 = vmatmul.mubr.bf16.gmra.mrb[0].mxu0 %v1101
    %v1754 = vpop.f32.mrb[0].mxu0
    %v1755 = vadd.f32 %v1546, %v1754
    %v1756 = vpop.f32.mrb[0].mxu0
    %v1757 = vpop.f32.mrb[0].mxu0
    %v1758 = vadd.f32 %v1549, %v1757
    %v1759 = vpop.f32.mrb[0].mxu0
    %1760 = vdwg.mxu0
    %1761 = vst [vmem:[%s6] sm:$0xff] %v1635
    %1762 = vst [vmem:[%s6 + $0x8] sm:$0xff] %v1638
    %1763 = vst [vmem:[%s6 + $0x10] sm:$0xff] %v1643
    %1764 = vst [vmem:[%s6 + $0x18] sm:$0xff] %v1646
    %1765 = vst [vmem:[%s6 + $0x20] sm:$0xff] %v1651
    %1766 = vst [vmem:[%s6 + $0x28] sm:$0xff] %v1654
    %1767 = vst [vmem:[%s6 + $0x30] sm:$0xff] %v1659
    %1768 = vst [vmem:[%s6 + $0x38] sm:$0xff] %v1662
    %1769 = vst [vmem:[%s6 + $0x40] sm:$0xff] %v1667
    %1770 = vst [vmem:[%s6 + $0x48] sm:$0xff] %v1670
    %1771 = vst [vmem:[%s6 + $0x50] sm:$0xff] %v1675
    %1772 = vst [vmem:[%s6 + $0x58] sm:$0xff] %v1678
    %1773 = vst [vmem:[%s6 + $0x60] sm:$0xff] %v1683
    %1774 = vst [vmem:[%s6 + $0x68] sm:$0xff] %v1686
    %1775 = vst [vmem:[%s6 + $0x70] sm:$0xff] %v1691
    %1776 = vst [vmem:[%s6 + $0x78] sm:$0xff] %v1694
    %1777 = vst [vmem:[%s6 + $0x80] sm:$0xff] %v1699
    %1778 = vst [vmem:[%s6 + $0x88] sm:$0xff] %v1702
    %1779 = vst [vmem:[%s6 + $0x90] sm:$0xff] %v1707
    %1780 = vst [vmem:[%s6 + $0x98] sm:$0xff] %v1710
    %1781 = vst [vmem:[%s6 + $0xa0] sm:$0xff] %v1715
    %1782 = vst [vmem:[%s6 + $0xa8] sm:$0xff] %v1718
    %1783 = vst [vmem:[%s6 + $0xb0] sm:$0xff] %v1723
    %1784 = vst [vmem:[%s6 + $0xb8] sm:$0xff] %v1726
    %1785 = vst [vmem:[%s6 + $0xc0] sm:$0xff] %v1731
    %1786 = vst [vmem:[%s6 + $0xc8] sm:$0xff] %v1734
    %1787 = vst [vmem:[%s6 + $0xd0] sm:$0xff] %v1739
    %1788 = vst [vmem:[%s6 + $0xd8] sm:$0xff] %v1742
    %1789 = vst [vmem:[%s6 + $0xe0] sm:$0xff] %v1747
    %1790 = vst [vmem:[%s6 + $0xe8] sm:$0xff] %v1750
    %1791 = vst [vmem:[%s6 + $0xf0] sm:$0xff] %v1755
    %1792 = vst [vmem:[%s6 + $0xf8] sm:$0xff] %v1758
    %v1793 = vld [vmem:[%s3] sm:$0xff]
    %v1794 = vld [vmem:[%s3 + $0x8] sm:$0xff]
    %v1795 = vld [vmem:[%s3 + $0x10] sm:$0xff]
    %v1796 = vld [vmem:[%s3 + $0x18] sm:$0xff]
    %v1797 = vld [vmem:[%s3 + $0x20] sm:$0xff]
    %v1798 = vld [vmem:[%s3 + $0x28] sm:$0xff]
    %v1799 = vld [vmem:[%s3 + $0x30] sm:$0xff]
    %v1800 = vld [vmem:[%s3 + $0x38] sm:$0xff]
    %v1801 = vld [vmem:[%s3 + $0x40] sm:$0xff]
    %v1802 = vld [vmem:[%s3 + $0x48] sm:$0xff]
    %v1803 = vld [vmem:[%s3 + $0x50] sm:$0xff]
    %v1804 = vld [vmem:[%s3 + $0x58] sm:$0xff]
    %v1805 = vld [vmem:[%s3 + $0x60] sm:$0xff]
    %v1806 = vld [vmem:[%s3 + $0x68] sm:$0xff]
    %v1807 = vld [vmem:[%s3 + $0x70] sm:$0xff]
    %v1808 = vld [vmem:[%s3 + $0x78] sm:$0xff]
    %v1809 = vld [vmem:[%s3 + $0x80] sm:$0xff]
    %v1810 = vld [vmem:[%s3 + $0x88] sm:$0xff]
    %v1811 = vld [vmem:[%s3 + $0x90] sm:$0xff]
    %v1812 = vld [vmem:[%s3 + $0x98] sm:$0xff]
    %v1813 = vld [vmem:[%s3 + $0xa0] sm:$0xff]
    %v1814 = vld [vmem:[%s3 + $0xa8] sm:$0xff]
    %v1815 = vld [vmem:[%s3 + $0xb0] sm:$0xff]
    %v1816 = vld [vmem:[%s3 + $0xb8] sm:$0xff]
    %v1817 = vld [vmem:[%s3 + $0xc0] sm:$0xff]
    %v1818 = vld [vmem:[%s3 + $0xc8] sm:$0xff]
    %v1819 = vld [vmem:[%s3 + $0xd0] sm:$0xff]
    %v1820 = vld [vmem:[%s3 + $0xd8] sm:$0xff]
    %v1821 = vld [vmem:[%s3 + $0xe0] sm:$0xff]
    %v1822 = vld [vmem:[%s3 + $0xe8] sm:$0xff]
    %v1823 = vld [vmem:[%s3 + $0xf0] sm:$0xff]
    %v1824 = vld [vmem:[%s3 + $0xf8] sm:$0xff]
    %vm1825 = vcmp.gt.f32.partialorder %v1793, 0.5
    %vm1826 = vcmp.gt.f32.partialorder %v1794, 0.5
    %vm1827 = vcmp.gt.f32.partialorder %v1795, 0.5
    %vm1828 = vcmp.gt.f32.partialorder %v1796, 0.5
    %vm1829 = vcmp.gt.f32.partialorder %v1797, 0.5
    %vm1830 = vcmp.gt.f32.partialorder %v1798, 0.5
    %vm1831 = vcmp.gt.f32.partialorder %v1799, 0.5
    %vm1832 = vcmp.gt.f32.partialorder %v1800, 0.5
    %vm1833 = vcmp.gt.f32.partialorder %v1801, 0.5
    %vm1834 = vcmp.gt.f32.partialorder %v1802, 0.5
    %vm1835 = vcmp.gt.f32.partialorder %v1803, 0.5
    %vm1836 = vcmp.gt.f32.partialorder %v1804, 0.5
    %vm1837 = vcmp.gt.f32.partialorder %v1805, 0.5
    %vm1838 = vcmp.gt.f32.partialorder %v1806, 0.5
    %vm1839 = vcmp.gt.f32.partialorder %v1807, 0.5
    %vm1840 = vcmp.gt.f32.partialorder %v1808, 0.5
    %vm1841 = vcmp.gt.f32.partialorder %v1809, 0.5
    %vm1842 = vcmp.gt.f32.partialorder %v1810, 0.5
    %vm1843 = vcmp.gt.f32.partialorder %v1811, 0.5
    %vm1844 = vcmp.gt.f32.partialorder %v1812, 0.5
    %vm1845 = vcmp.gt.f32.partialorder %v1813, 0.5
    %vm1846 = vcmp.gt.f32.partialorder %v1814, 0.5
    %vm1847 = vcmp.gt.f32.partialorder %v1815, 0.5
    %vm1848 = vcmp.gt.f32.partialorder %v1816, 0.5
    %vm1849 = vcmp.gt.f32.partialorder %v1817, 0.5
    %vm1850 = vcmp.gt.f32.partialorder %v1818, 0.5
    %vm1851 = vcmp.gt.f32.partialorder %v1819, 0.5
    %vm1852 = vcmp.gt.f32.partialorder %v1820, 0.5
    %vm1853 = vcmp.gt.f32.partialorder %v1821, 0.5
    %vm1854 = vcmp.gt.f32.partialorder %v1822, 0.5
    %vm1855 = vcmp.gt.f32.partialorder %v1823, 0.5
    %vm1856 = vcmp.gt.f32.partialorder %v1824, 0.5
    %v1857 = vsel %vm1825, 1, 0
    %v1858 = vsel %vm1826, 1, 0
    %v1859 = vsel %vm1827, 1, 0
    %v1860 = vsel %vm1828, 1, 0
    %v1861 = vsel %vm1829, 1, 0
    %v1862 = vsel %vm1830, 1, 0
    %v1863 = vsel %vm1831, 1, 0
    %v1864 = vsel %vm1832, 1, 0
    %v1865 = vsel %vm1833, 1, 0
    %v1866 = vsel %vm1834, 1, 0
    %v1867 = vsel %vm1835, 1, 0
    %v1868 = vsel %vm1836, 1, 0
    %v1869 = vsel %vm1837, 1, 0
    %v1870 = vsel %vm1838, 1, 0
    %v1871 = vsel %vm1839, 1, 0
    %v1872 = vsel %vm1840, 1, 0
    %v1873 = vsel %vm1841, 1, 0
    %v1874 = vsel %vm1842, 1, 0
    %v1875 = vsel %vm1843, 1, 0
    %v1876 = vsel %vm1844, 1, 0
    %v1877 = vsel %vm1845, 1, 0
    %v1878 = vsel %vm1846, 1, 0
    %v1879 = vsel %vm1847, 1, 0
    %v1880 = vsel %vm1848, 1, 0
    %v1881 = vsel %vm1849, 1, 0
    %v1882 = vsel %vm1850, 1, 0
    %v1883 = vsel %vm1851, 1, 0
    %v1884 = vsel %vm1852, 1, 0
    %v1885 = vsel %vm1853, 1, 0
    %v1886 = vsel %vm1854, 1, 0
    %v1887 = vsel %vm1855, 1, 0
    %v1888 = vsel %vm1856, 1, 0
    %1889 = vset.pattern.permute.xlu0 0
    %1890 = vperm.xlu0 %1889, %v1857
    %v1891 = vpop.permute.xlu0 %1890
    %1892 = vset.pattern.permute.xlu0 0
    %1893 = vperm.xlu0 %1892, %v1858
    %v1894 = vpop.permute.xlu0 %1893
    %1895 = vset.pattern.permute.xlu0 0
    %1896 = vperm.xlu0 %1895, %v1859
    %v1897 = vpop.permute.xlu0 %1896
    %1898 = vset.pattern.permute.xlu0 0
    %1899 = vperm.xlu0 %1898, %v1860
    %v1900 = vpop.permute.xlu0 %1899
    %1901 = vset.pattern.permute.xlu0 0
    %1902 = vperm.xlu0 %1901, %v1861
    %v1903 = vpop.permute.xlu0 %1902
    %1904 = vset.pattern.permute.xlu0 0
    %1905 = vperm.xlu0 %1904, %v1862
    %v1906 = vpop.permute.xlu0 %1905
    %1907 = vset.pattern.permute.xlu0 0
    %1908 = vperm.xlu0 %1907, %v1863
    %v1909 = vpop.permute.xlu0 %1908
    %1910 = vset.pattern.permute.xlu0 0
    %1911 = vperm.xlu0 %1910, %v1864
    %v1912 = vpop.permute.xlu0 %1911
    %1913 = vset.pattern.permute.xlu0 0
    %1914 = vperm.xlu0 %1913, %v1865
    %v1915 = vpop.permute.xlu0 %1914
    %1916 = vset.pattern.permute.xlu0 0
    %1917 = vperm.xlu0 %1916, %v1866
    %v1918 = vpop.permute.xlu0 %1917
    %1919 = vset.pattern.permute.xlu0 0
    %1920 = vperm.xlu0 %1919, %v1867
    %v1921 = vpop.permute.xlu0 %1920
    %1922 = vset.pattern.permute.xlu0 0
    %1923 = vperm.xlu0 %1922, %v1868
    %v1924 = vpop.permute.xlu0 %1923
    %1925 = vset.pattern.permute.xlu0 0
    %1926 = vperm.xlu0 %1925, %v1869
    %v1927 = vpop.permute.xlu0 %1926
    %1928 = vset.pattern.permute.xlu0 0
    %1929 = vperm.xlu0 %1928, %v1870
    %v1930 = vpop.permute.xlu0 %1929
    %1931 = vset.pattern.permute.xlu0 0
    %1932 = vperm.xlu0 %1931, %v1871
    %v1933 = vpop.permute.xlu0 %1932
    %1934 = vset.pattern.permute.xlu0 0
    %1935 = vperm.xlu0 %1934, %v1872
    %v1936 = vpop.permute.xlu0 %1935
    %1937 = vset.pattern.permute.xlu0 0
    %1938 = vperm.xlu0 %1937, %v1873
    %v1939 = vpop.permute.xlu0 %1938
    %1940 = vset.pattern.permute.xlu0 0
    %1941 = vperm.xlu0 %1940, %v1874
    %v1942 = vpop.permute.xlu0 %1941
    %1943 = vset.pattern.permute.xlu0 0
    %1944 = vperm.xlu0 %1943, %v1875
    %v1945 = vpop.permute.xlu0 %1944
    %1946 = vset.pattern.permute.xlu0 0
    %1947 = vperm.xlu0 %1946, %v1876
    %v1948 = vpop.permute.xlu0 %1947
    %1949 = vset.pattern.permute.xlu0 0
    %1950 = vperm.xlu0 %1949, %v1877
    %v1951 = vpop.permute.xlu0 %1950
    %1952 = vset.pattern.permute.xlu0 0
    %1953 = vperm.xlu0 %1952, %v1878
    %v1954 = vpop.permute.xlu0 %1953
    %1955 = vset.pattern.permute.xlu0 0
    %1956 = vperm.xlu0 %1955, %v1879
    %v1957 = vpop.permute.xlu0 %1956
    %1958 = vset.pattern.permute.xlu0 0
    %1959 = vperm.xlu0 %1958, %v1880
    %v1960 = vpop.permute.xlu0 %1959
    %1961 = vset.pattern.permute.xlu0 0
    %1962 = vperm.xlu0 %1961, %v1881
    %v1963 = vpop.permute.xlu0 %1962
    %1964 = vset.pattern.permute.xlu0 0
    %1965 = vperm.xlu0 %1964, %v1882
    %v1966 = vpop.permute.xlu0 %1965
    %1967 = vset.pattern.permute.xlu0 0
    %1968 = vperm.xlu0 %1967, %v1883
    %v1969 = vpop.permute.xlu0 %1968
    %1970 = vset.pattern.permute.xlu0 0
    %1971 = vperm.xlu0 %1970, %v1884
    %v1972 = vpop.permute.xlu0 %1971
    %1973 = vset.pattern.permute.xlu0 0
    %1974 = vperm.xlu0 %1973, %v1885
    %v1975 = vpop.permute.xlu0 %1974
    %1976 = vset.pattern.permute.xlu0 0
    %1977 = vperm.xlu0 %1976, %v1886
    %v1978 = vpop.permute.xlu0 %1977
    %1979 = vset.pattern.permute.xlu0 0
    %1980 = vperm.xlu0 %1979, %v1887
    %v1981 = vpop.permute.xlu0 %1980
    %1982 = vset.pattern.permute.xlu0 0
    %1983 = vperm.xlu0 %1982, %v1888
    %v1984 = vpop.permute.xlu0 %1983
    %vm1985 = vcmp.eq.s32.totalorder %v1891, 1
    %vm1986 = vcmp.eq.s32.totalorder %v1894, 1
    %vm1987 = vcmp.eq.s32.totalorder %v1897, 1
    %vm1988 = vcmp.eq.s32.totalorder %v1900, 1
    %vm1989 = vcmp.eq.s32.totalorder %v1903, 1
    %vm1990 = vcmp.eq.s32.totalorder %v1906, 1
    %vm1991 = vcmp.eq.s32.totalorder %v1909, 1
    %vm1992 = vcmp.eq.s32.totalorder %v1912, 1
    %vm1993 = vcmp.eq.s32.totalorder %v1915, 1
    %vm1994 = vcmp.eq.s32.totalorder %v1918, 1
    %vm1995 = vcmp.eq.s32.totalorder %v1921, 1
    %vm1996 = vcmp.eq.s32.totalorder %v1924, 1
    %vm1997 = vcmp.eq.s32.totalorder %v1927, 1
    %vm1998 = vcmp.eq.s32.totalorder %v1930, 1
    %vm1999 = vcmp.eq.s32.totalorder %v1933, 1
    %vm2000 = vcmp.eq.s32.totalorder %v1936, 1
    %vm2001 = vcmp.eq.s32.totalorder %v1939, 1
    %vm2002 = vcmp.eq.s32.totalorder %v1942, 1
    %vm2003 = vcmp.eq.s32.totalorder %v1945, 1
    %vm2004 = vcmp.eq.s32.totalorder %v1948, 1
    %vm2005 = vcmp.eq.s32.totalorder %v1951, 1
    %vm2006 = vcmp.eq.s32.totalorder %v1954, 1
    %vm2007 = vcmp.eq.s32.totalorder %v1957, 1
    %vm2008 = vcmp.eq.s32.totalorder %v1960, 1
    %vm2009 = vcmp.eq.s32.totalorder %v1963, 1
    %vm2010 = vcmp.eq.s32.totalorder %v1966, 1
    %vm2011 = vcmp.eq.s32.totalorder %v1969, 1
    %vm2012 = vcmp.eq.s32.totalorder %v1972, 1
    %vm2013 = vcmp.eq.s32.totalorder %v1975, 1
    %vm2014 = vcmp.eq.s32.totalorder %v1978, 1
    %vm2015 = vcmp.eq.s32.totalorder %v1981, 1
    %vm2016 = vcmp.eq.s32.totalorder %v1984, 1
    %v2017 = vsel %vm1985, %v1635, -inf
    %v2018 = vsel %vm1986, %v1638, -inf
    %v2019 = vsel %vm1987, %v1643, -inf
    %v2020 = vsel %vm1988, %v1646, -inf
    %v2021 = vsel %vm1989, %v1651, -inf
    %v2022 = vsel %vm1990, %v1654, -inf
    %v2023 = vsel %vm1991, %v1659, -inf
    %v2024 = vsel %vm1992, %v1662, -inf
    %v2025 = vsel %vm1993, %v1667, -inf
    %v2026 = vsel %vm1994, %v1670, -inf
    %v2027 = vsel %vm1995, %v1675, -inf
    %v2028 = vsel %vm1996, %v1678, -inf
    %v2029 = vsel %vm1997, %v1683, -inf
    %v2030 = vsel %vm1998, %v1686, -inf
    %v2031 = vsel %vm1999, %v1691, -inf
    %v2032 = vsel %vm2000, %v1694, -inf
    %v2033 = vsel %vm2001, %v1699, -inf
    %v2034 = vsel %vm2002, %v1702, -inf
    %v2035 = vsel %vm2003, %v1707, -inf
    %v2036 = vsel %vm2004, %v1710, -inf
    %v2037 = vsel %vm2005, %v1715, -inf
    %v2038 = vsel %vm2006, %v1718, -inf
    %v2039 = vsel %vm2007, %v1723, -inf
    %v2040 = vsel %vm2008, %v1726, -inf
    %v2041 = vsel %vm2009, %v1731, -inf
    %v2042 = vsel %vm2010, %v1734, -inf
    %v2043 = vsel %vm2011, %v1739, -inf
    %v2044 = vsel %vm2012, %v1742, -inf
    %v2045 = vsel %vm2013, %v1747, -inf
    %v2046 = vsel %vm2014, %v1750, -inf
    %v2047 = vsel %vm2015, %v1755, -inf
    %v2048 = vsel %vm2016, %v1758, -inf
    %v2049 = vmax.f32 %v2017, %v2021
    %v2050 = vmax.f32 %v2018, %v2022
    %v2051 = vmax.f32 %v2019, %v2023
    %v2052 = vmax.f32 %v2020, %v2024
    %v2053 = vmax.f32 %v2049, %v2025
    %v2054 = vmax.f32 %v2050, %v2026
    %v2055 = vmax.f32 %v2051, %v2027
    %v2056 = vmax.f32 %v2052, %v2028
    %v2057 = vmax.f32 %v2053, %v2029
    %v2058 = vmax.f32 %v2054, %v2030
    %v2059 = vmax.f32 %v2055, %v2031
    %v2060 = vmax.f32 %v2056, %v2032
    %v2061 = vmax.f32 %v2057, %v2033
    %v2062 = vmax.f32 %v2058, %v2034
    %v2063 = vmax.f32 %v2059, %v2035
    %v2064 = vmax.f32 %v2060, %v2036
    %v2065 = vmax.f32 %v2061, %v2037
    %v2066 = vmax.f32 %v2062, %v2038
    %v2067 = vmax.f32 %v2063, %v2039
    %v2068 = vmax.f32 %v2064, %v2040
    %v2069 = vmax.f32 %v2065, %v2041
    %v2070 = vmax.f32 %v2066, %v2042
    %v2071 = vmax.f32 %v2067, %v2043
    %v2072 = vmax.f32 %v2068, %v2044
    %v2073 = vmax.f32 %v2069, %v2045
    %v2074 = vmax.f32 %v2070, %v2046
    %v2075 = vmax.f32 %v2071, %v2047
    %v2076 = vmax.f32 %v2072, %v2048
    %v2077 = vmax.f32 %v2073, %v2074
    %v2078 = vmax.f32 %v2075, %v2076
    %v2079 = vmax.f32 %v2077, %v2078
    %v2080 = vrot.slane %v2079, 4
    %v2081 = vmax.f32 %v2079, %v2080
    %v2082 = vrot.slane %v2081, 2
    %v2083 = vmax.f32 %v2081, %v2082
    %v2084 = vrot.slane %v2083, 1
    %v2085 = vmax.f32 %v2083, %v2084
    %2086 = vst [vmem:[#allocation2] sm:$0x1] %v2085
    // Predicated region
    $region26: #{sage_encoder_forward.1} parent=1 // pred_check
      _
    $region27: #{sage_encoder_forward.1} parent=1 // pred_check_branch
      %2088 = sbr.rel (0) target = $region29
    $region28: #{sage_encoder_forward.1} parent=1 // pred_region
      _
    $region29: #{sage_encoder_forward.1} parent=1 // pred_fallthru
      _
    // Predicated region
    $region30: #{sage_encoder_forward.1} parent=1 // pred_check
      _
    $region31: #{sage_encoder_forward.1} parent=1 // pred_check_branch
      %2090 = sbr.rel (0) target = $region33
    $region32: #{sage_encoder_forward.1} parent=1 // pred_region
      %s2092 = ssub.s32 16, 16
      %2093 = vsyncadd [#allocation3], %s2092
      %s2095 = sshll.u32 [#allocation2], 4
      %s2096 = int_to_ptr.vmem [resolvable:$true] %s2095
      %2098 = dma.vmem_to_hbm [thread:$0]  %s2096, 16, %s7, [#allocation3]
    $region33: #{sage_encoder_forward.1} parent=1 // pred_fallthru
      _
    // Predicated region
    $region34: #{sage_encoder_forward.1} parent=1 // pred_check
      _
    $region35: #{sage_encoder_forward.1} parent=1 // pred_check_branch
      %2100 = sbr.rel (0) target = $region37
    $region36: #{sage_encoder_forward.1} parent=1 // pred_region
      _
    $region37: #{sage_encoder_forward.1} parent=1 // pred_fallthru
      _
    // Predicated region
    $region38: #{sage_encoder_forward.1} parent=1 // pred_check
      _
    $region39: #{sage_encoder_forward.1} parent=1 // pred_check_branch
      %2102 = sbr.rel (0) target = $region41
    $region40: #{sage_encoder_forward.1} parent=1 // pred_region
      %2103 = dma.done [#allocation3], 16
    $region41: #{sage_encoder_forward.1} parent=1 // pred_fallthru
      _
    %2104 = vsyncpa [#allocation3], 1

</llo_original>
